<compile_context>
chip_gen: v5e
topology: v5e:2x2
jax: 0.10.0
libtpu: 0.0.40
codegen_flags: <defaults>
</compile_context>

<pallas_src>
import math

import numpy as np
import jax
import jax.numpy as jnp
from jax.experimental import pallas as pl
from jax.experimental.pallas import tpu as pltpu


def _attention_kernel(x_ref, wq_ref, bq_ref, wk_ref, bk_ref, wv_ref, bv_ref,
                      ssel_ref, dsum_ref, aexp_ref, wo_ref, bo_ref, out_ref):
    f32 = jnp.float32
    x = x_ref[...]                                    # (T, P*E) lane-dense tokens

    # Projections (MXU).  Head tiling / replication is pre-folded into the
    # weights, so q/k/v land directly in the (token, g*E + h*D + d) layout.
    qt = jnp.dot(x, wq_ref[...], preferred_element_type=f32) + bq_ref[...]
    kr = jnp.dot(x, wk_ref[...], preferred_element_type=f32) + bk_ref[...]
    vr = jnp.dot(x, wv_ref[...], preferred_element_type=f32) + bv_ref[...]

    # scores[s,h,g] = <q[s,h,:], k[s,g,:]>/sqrt(D): one full-width VPU multiply
    # + one MXU reduce against a constant scaled selection matrix.
    scores = jnp.dot(qt * kr, ssel_ref[...], preferred_element_type=f32)

    # Stable softmax over g.  Subtracting the per-row max (a constant within
    # every (token, h) group) leaves the softmax unchanged.
    m = jnp.max(scores, axis=-1, keepdims=True)
    p = jnp.exp(scores - m)
    denom = jnp.dot(p, dsum_ref[...], preferred_element_type=f32)  # per-h sums, broadcast back
    a = p / denom

    # ctx[s,h,:] = sum_g a[s,h,g] * v[s,g,:]: expand the attention weights back
    # to full lane width on the MXU, one VPU multiply, and fold the sum over g
    # into the output-projection weight (also MXU).
    ar = jnp.dot(a, aexp_ref[...], preferred_element_type=f32)
    out = jnp.dot(ar * vr, wo_ref[...], preferred_element_type=f32) + bo_ref[...]
    out_ref[...] = out.astype(out_ref.dtype)


def scaled_dot_product_attention_model(src, params, *, num_heads,
                                       max_tile_rows=512):
    S, E = src.shape
    H = num_heads
    assert E % H == 0
    D = E // H
    wq, bq, wk, bk, wv, bv, wo, bo = params
    scale = 1.0 / math.sqrt(D)

    # Pack P tokens side-by-side along lanes so every kernel tensor is
    # >= 128 lanes wide (lane-dense loads/stores, no sub-vreg slicing).
    P = 128 // E if (E <= 128 and 128 % E == 0) else 1

    # ---- constant head-bookkeeping matrices (host-side, built once) ----
    gg, hh, dd = np.indices((H, H, D))            # lane index = g*E + h*D + d
    rep_idx = (gg * D + dd).reshape(-1)           # -> g*D + d (replicate head g over h)
    fold_idx = (hh * D + dd).reshape(-1)          # -> h*D + d (fold sum over g into Wo)

    ssel = np.zeros((H * E, H * H), np.float32)   # (q*k) lanes -> scores[h*H+g], scaled
    ssel[(gg * E + hh * D + dd).reshape(-1), (hh * H + gg).reshape(-1)] = scale

    dsum = np.kron(np.eye(H, dtype=np.float32), np.ones((H, H), np.float32))

    aexp = np.zeros((H * H, H * E), np.float32)   # a[h*H+g] -> lanes g*E + h*D + d
    aexp[(hh * H + gg).reshape(-1), (gg * E + hh * D + dd).reshape(-1)] = 1.0

    wq_t, bq_t = jnp.tile(wq, (1, H)), jnp.tile(bq, (1, H))   # q tiled over g blocks
    wk_r, bk_r = wk[:, rep_idx], bk[:, rep_idx]               # k head-g replicated over h
    wv_r, bv_r = wv[:, rep_idx], bv[:, rep_idx]
    wo_f = wo[fold_idx, :]                                    # output proj, sum-over-g folded

    # ---- token packing: block-diagonal weights (per token slot), tiled biases
    eye_p = jnp.eye(P, dtype=jnp.float32)

    def bd(m):
        return jnp.kron(eye_p, jnp.asarray(m, jnp.float32))

    def bt(b):
        return jnp.tile(jnp.asarray(b, jnp.float32), (1, P))

    consts = (bd(wq_t), bt(bq_t), bd(wk_r), bt(bk_r), bd(wv_r), bt(bv_r),
              bd(ssel), bd(dsum), bd(aexp), bd(wo_f), bt(bo))

    # ---- grid: one tile on single-TC chips (v5e/v6e), two parallel tiles on
    # dual-TC v7x; packed rows padded to an 8-sublane multiple per tile.
    kind = jax.devices()[0].device_kind.lower()
    num_steps = 2 if "v7" in kind else 1
    rows = -(-S // P)
    num_steps = max(num_steps, -(-rows // max_tile_rows))
    rows_pad = -(-rows // (8 * num_steps)) * (8 * num_steps)
    s_pad = rows_pad * P
    tile_rows = rows_pad // num_steps
    lane_w = P * E

    x = src if s_pad == S else jnp.pad(src, ((0, s_pad - S), (0, 0)))
    x_packed = x.reshape(rows_pad, lane_w)        # free row-major repack

    flops = 2 * rows_pad * (
        3 * lane_w * (P * H * E) + (P * H * E) * (P * H * H)
        + (P * H * H) * (P * H * H) + (P * H * H) * (P * H * E)
        + (P * H * E) * lane_w)
    bytes_accessed = 4 * (x_packed.size + rows_pad * lane_w
                          + sum(int(np.prod(c.shape)) for c in consts))
    cost = pl.CostEstimate(flops=int(flops),
                           transcendentals=int(rows_pad * P * H * H),
                           bytes_accessed=int(bytes_accessed))

    out_packed = pl.pallas_call(
        _attention_kernel,
        out_shape=jax.ShapeDtypeStruct((rows_pad, lane_w), jnp.float32),
        grid=(num_steps,),
        in_specs=[pl.BlockSpec((tile_rows, lane_w), lambda i: (i, 0))]
                 + [pl.BlockSpec(c.shape, lambda i: (0, 0)) for c in consts],
        out_specs=pl.BlockSpec((tile_rows, lane_w), lambda i: (i, 0)),
        compiler_params=pltpu.CompilerParams(
            dimension_semantics=("parallel",)),
        cost_estimate=cost,
    )(x_packed, *consts)

    # Lane-dense kernel output -> module output (S, H, D).
    return out_packed.reshape(s_pad, E)[:S].reshape(S, H, D)


def init_params(key, embedding_dim):
    """Deterministic nn.Linear-style init: uniform(-1/sqrt(in), 1/sqrt(in))."""
    bound = 1.0 / math.sqrt(embedding_dim)
    keys = jax.random.split(key, 8)

    def u(k, shape):
        return jax.random.uniform(k, shape, jnp.float32, -bound, bound)

    wq, bq = u(keys[0], (embedding_dim, embedding_dim)), u(keys[1], (1, embedding_dim))
    wk, bk = u(keys[2], (embedding_dim, embedding_dim)), u(keys[3], (1, embedding_dim))
    wv, bv = u(keys[4], (embedding_dim, embedding_dim)), u(keys[5], (1, embedding_dim))
    wo, bo = u(keys[6], (embedding_dim, embedding_dim)), u(keys[7], (1, embedding_dim))
    return (wq, bq, wk, bk, wv, bv, wo, bo)


def reference_forward(src, params, num_heads):
    """Pure-JAX mirror of the PyTorch forward, for validation."""
    wq, bq, wk, bk, wv, bv, wo, bo = params
    E = src.shape[-1]
    D = E // num_heads
    q = (src @ wq + bq).reshape(-1, num_heads, D)
    k = (src @ wk + bk).reshape(-1, num_heads, D)
    v = (src @ wv + bv).reshape(-1, num_heads, D)
    scores = jnp.einsum('shd,sgd->shg', q, k) / jnp.sqrt(jnp.float32(D))
    attn = jax.nn.softmax(scores, axis=-1)
    out = jnp.einsum('shg,sgd->shd', attn, v).reshape(-1, E)
    out = out @ wo + bo
    return out.reshape(-1, num_heads, D)


if __name__ == "__main__":
    embedding_dim = 32
    num_heads = 4
    seq = 128

    key = jax.random.PRNGKey(0)
    k_src, k_params = jax.random.split(key)
    src = jax.random.normal(k_src, (seq, embedding_dim), dtype=jnp.float32)
    params = init_params(k_params, embedding_dim)

    out = scaled_dot_product_attention_model(src, params, num_heads=num_heads)
    out = jax.block_until_ready(out)

    ref = reference_forward(src, params, num_heads)
    assert out.shape == (seq, num_heads, embedding_dim // num_heads)
    assert jnp.allclose(out, ref, atol=1e-4, rtol=1e-4)

    print("KERNEL_OK")
</pallas_src>

<mosaic_0001>
module attributes {stable_mosaic.version = 11 : i64} {
  func.func @_attention_kernel(%arg0: i32, %arg1: memref<32x128xf32, #tpu.memory_space<vmem>>, %arg2: memref<128x512xf32, #tpu.memory_space<vmem>>, %arg3: memref<1x512xf32, #tpu.memory_space<vmem>>, %arg4: memref<128x512xf32, #tpu.memory_space<vmem>>, %arg5: memref<1x512xf32, #tpu.memory_space<vmem>>, %arg6: memref<128x512xf32, #tpu.memory_space<vmem>>, %arg7: memref<1x512xf32, #tpu.memory_space<vmem>>, %arg8: memref<512x64xf32, #tpu.memory_space<vmem>>, %arg9: memref<64x64xf32, #tpu.memory_space<vmem>>, %arg10: memref<64x512xf32, #tpu.memory_space<vmem>>, %arg11: memref<512x128xf32, #tpu.memory_space<vmem>>, %arg12: memref<1x128xf32, #tpu.memory_space<vmem>>, %arg13: memref<32x128xf32, #tpu.memory_space<vmem>>) attributes {dimension_semantics = [#tpu.dimension_semantics<parallel>], iteration_bounds = array<i64: 1>, scalar_prefetch = 0 : i64, scratch_operands = 0 : i64, tpu.core_type = #tpu.core_type<tc>, window_params = [{transform_indices = @transform_0, window_bounds = array<i64: 32, 128>}, {pipeline_mode = #tpu.pipeline_mode<synchronous>, transform_indices = @transform_1, window_bounds = array<i64: 128, 512>}, {pipeline_mode = #tpu.pipeline_mode<synchronous>, transform_indices = @transform_2, window_bounds = array<i64: 1, 512>}, {pipeline_mode = #tpu.pipeline_mode<synchronous>, transform_indices = @transform_3, window_bounds = array<i64: 128, 512>}, {pipeline_mode = #tpu.pipeline_mode<synchronous>, transform_indices = @transform_4, window_bounds = array<i64: 1, 512>}, {pipeline_mode = #tpu.pipeline_mode<synchronous>, transform_indices = @transform_5, window_bounds = array<i64: 128, 512>}, {pipeline_mode = #tpu.pipeline_mode<synchronous>, transform_indices = @transform_6, window_bounds = array<i64: 1, 512>}, {pipeline_mode = #tpu.pipeline_mode<synchronous>, transform_indices = @transform_7, window_bounds = array<i64: 512, 64>}, {pipeline_mode = #tpu.pipeline_mode<synchronous>, transform_indices = @transform_8, window_bounds = array<i64: 64, 64>}, {pipeline_mode = #tpu.pipeline_mode<synchronous>, transform_indices = @transform_9, window_bounds = array<i64: 64, 512>}, {pipeline_mode = #tpu.pipeline_mode<synchronous>, transform_indices = @transform_10, window_bounds = array<i64: 512, 128>}, {pipeline_mode = #tpu.pipeline_mode<synchronous>, transform_indices = @transform_11, window_bounds = array<i64: 1, 128>}, {transform_indices = @transform_12, window_bounds = array<i64: 32, 128>}]} {
    %c0 = arith.constant 0 : index
    %c0_0 = arith.constant 0 : index
    %0 = vector.load %arg1[%c0, %c0_0] : memref<32x128xf32, #tpu.memory_space<vmem>>, vector<32x128xf32>
    %c0_1 = arith.constant 0 : index
    %c0_2 = arith.constant 0 : index
    %1 = vector.load %arg2[%c0_1, %c0_2] : memref<128x512xf32, #tpu.memory_space<vmem>>, vector<128x512xf32>
    %cst = arith.constant dense<0.000000e+00> : vector<32x512xf32>
    %2 = tpu.matmul %0, %1, %cst {dimension_numbers = #tpu.dot_dimension_numbers<[1], [0], [0], [1], [0, 0, 1, 1], [], []>} : vector<32x128xf32>, vector<128x512xf32>, vector<32x512xf32> -> vector<32x512xf32>
    %c0_3 = arith.constant 0 : index
    %c0_4 = arith.constant 0 : index
    %3 = vector.load %arg3[%c0_3, %c0_4] : memref<1x512xf32, #tpu.memory_space<vmem>>, vector<1x512xf32>
    %4 = vector.broadcast %3 : vector<1x512xf32> to vector<32x512xf32>
    %5 = arith.addf %2, %4 : vector<32x512xf32>
    %c0_5 = arith.constant 0 : index
    %c0_6 = arith.constant 0 : index
    %6 = vector.load %arg4[%c0_5, %c0_6] : memref<128x512xf32, #tpu.memory_space<vmem>>, vector<128x512xf32>
    %cst_7 = arith.constant dense<0.000000e+00> : vector<32x512xf32>
    %7 = tpu.matmul %0, %6, %cst_7 {dimension_numbers = #tpu.dot_dimension_numbers<[1], [0], [0], [1], [0, 0, 1, 1], [], []>} : vector<32x128xf32>, vector<128x512xf32>, vector<32x512xf32> -> vector<32x512xf32>
    %c0_8 = arith.constant 0 : index
    %c0_9 = arith.constant 0 : index
    %8 = vector.load %arg5[%c0_8, %c0_9] : memref<1x512xf32, #tpu.memory_space<vmem>>, vector<1x512xf32>
    %9 = vector.broadcast %8 : vector<1x512xf32> to vector<32x512xf32>
    %10 = arith.addf %7, %9 : vector<32x512xf32>
    %c0_10 = arith.constant 0 : index
    %c0_11 = arith.constant 0 : index
    %11 = vector.load %arg6[%c0_10, %c0_11] : memref<128x512xf32, #tpu.memory_space<vmem>>, vector<128x512xf32>
    %cst_12 = arith.constant dense<0.000000e+00> : vector<32x512xf32>
    %12 = tpu.matmul %0, %11, %cst_12 {dimension_numbers = #tpu.dot_dimension_numbers<[1], [0], [0], [1], [0, 0, 1, 1], [], []>} : vector<32x128xf32>, vector<128x512xf32>, vector<32x512xf32> -> vector<32x512xf32>
    %c0_13 = arith.constant 0 : index
    %c0_14 = arith.constant 0 : index
    %13 = vector.load %arg7[%c0_13, %c0_14] : memref<1x512xf32, #tpu.memory_space<vmem>>, vector<1x512xf32>
    %14 = vector.broadcast %13 : vector<1x512xf32> to vector<32x512xf32>
    %15 = arith.addf %12, %14 : vector<32x512xf32>
    %16 = arith.mulf %5, %10 : vector<32x512xf32>
    %c0_15 = arith.constant 0 : index
    %c0_16 = arith.constant 0 : index
    %17 = vector.load %arg8[%c0_15, %c0_16] : memref<512x64xf32, #tpu.memory_space<vmem>>, vector<512x64xf32>
    %cst_17 = arith.constant dense<0.000000e+00> : vector<32x64xf32>
    %18 = tpu.matmul %16, %17, %cst_17 {dimension_numbers = #tpu.dot_dimension_numbers<[1], [0], [0], [1], [0, 0, 1, 1], [], []>} : vector<32x512xf32>, vector<512x64xf32>, vector<32x64xf32> -> vector<32x64xf32>
    %cst_18 = arith.constant dense<0xFF800000> : vector<32xf32>
    %19 = vector.multi_reduction <maximumf>, %18, %cst_18 [1] : vector<32x64xf32> to vector<32xf32>
    %20 = vector.shape_cast %19 : vector<32xf32> to vector<32x1xf32>
    %21 = vector.broadcast %20 : vector<32x1xf32> to vector<32x64xf32>
    %22 = arith.subf %18, %21 : vector<32x64xf32>
    %23 = math.exp %22 : vector<32x64xf32>
    %c0_19 = arith.constant 0 : index
    %c0_20 = arith.constant 0 : index
    %24 = vector.load %arg9[%c0_19, %c0_20] : memref<64x64xf32, #tpu.memory_space<vmem>>, vector<64x64xf32>
    %cst_21 = arith.constant dense<0.000000e+00> : vector<32x64xf32>
    %25 = tpu.matmul %23, %24, %cst_21 {dimension_numbers = #tpu.dot_dimension_numbers<[1], [0], [0], [1], [0, 0, 1, 1], [], []>} : vector<32x64xf32>, vector<64x64xf32>, vector<32x64xf32> -> vector<32x64xf32>
    %26 = arith.divf %23, %25 : vector<32x64xf32>
    %c0_22 = arith.constant 0 : index
    %c0_23 = arith.constant 0 : index
    %27 = vector.load %arg10[%c0_22, %c0_23] : memref<64x512xf32, #tpu.memory_space<vmem>>, vector<64x512xf32>
    %cst_24 = arith.constant dense<0.000000e+00> : vector<32x512xf32>
    %28 = tpu.matmul %26, %27, %cst_24 {dimension_numbers = #tpu.dot_dimension_numbers<[1], [0], [0], [1], [0, 0, 1, 1], [], []>} : vector<32x64xf32>, vector<64x512xf32>, vector<32x512xf32> -> vector<32x512xf32>
    %29 = arith.mulf %28, %15 : vector<32x512xf32>
    %c0_25 = arith.constant 0 : index
    %c0_26 = arith.constant 0 : index
    %30 = vector.load %arg11[%c0_25, %c0_26] : memref<512x128xf32, #tpu.memory_space<vmem>>, vector<512x128xf32>
    %cst_27 = arith.constant dense<0.000000e+00> : vector<32x128xf32>
    %31 = tpu.matmul %29, %30, %cst_27 {dimension_numbers = #tpu.dot_dimension_numbers<[1], [0], [0], [1], [0, 0, 1, 1], [], []>} : vector<32x512xf32>, vector<512x128xf32>, vector<32x128xf32> -> vector<32x128xf32>
    %c0_28 = arith.constant 0 : index
    %c0_29 = arith.constant 0 : index
    %32 = vector.load %arg12[%c0_28, %c0_29] : memref<1x128xf32, #tpu.memory_space<vmem>>, vector<1x128xf32>
    %33 = vector.broadcast %32 : vector<1x128xf32> to vector<32x128xf32>
    %34 = arith.addf %31, %33 : vector<32x128xf32>
    %c0_30 = arith.constant 0 : index
    %c0_31 = arith.constant 0 : index
    %35 = vector.load %arg13[%c0_30, %c0_31] : memref<32x128xf32, #tpu.memory_space<vmem>>, vector<32x128xf32>
    tpu.vector_store %arg13[%c0_30, %c0_31], %34 {strides = array<i32>} : memref<32x128xf32, #tpu.memory_space<vmem>>, vector<32x128xf32>,
    return
  }
  func.func @transform_0(%arg0: i32) -> (i32, i32) {
    %c0_i32 = arith.constant 0 : i32
    %c0_i32_0 = arith.constant 0 : i32
    return %arg0, %c0_i32 : i32, i32
  }
  func.func @transform_1(%arg0: i32) -> (i32, i32) {
    %c0_i32 = arith.constant 0 : i32
    %c0_i32_0 = arith.constant 0 : i32
    %c0_i32_1 = arith.constant 0 : i32
    return %c0_i32, %c0_i32_0 : i32, i32
  }
  func.func @transform_2(%arg0: i32) -> (i32, i32) {
    %c0_i32 = arith.constant 0 : i32
    %c0_i32_0 = arith.constant 0 : i32
    %c0_i32_1 = arith.constant 0 : i32
    return %c0_i32, %c0_i32_0 : i32, i32
  }
  func.func @transform_3(%arg0: i32) -> (i32, i32) {
    %c0_i32 = arith.constant 0 : i32
    %c0_i32_0 = arith.constant 0 : i32
    %c0_i32_1 = arith.constant 0 : i32
    return %c0_i32, %c0_i32_0 : i32, i32
  }
  func.func @transform_4(%arg0: i32) -> (i32, i32) {
    %c0_i32 = arith.constant 0 : i32
    %c0_i32_0 = arith.constant 0 : i32
    %c0_i32_1 = arith.constant 0 : i32
    return %c0_i32, %c0_i32_0 : i32, i32
  }
  func.func @transform_5(%arg0: i32) -> (i32, i32) {
    %c0_i32 = arith.constant 0 : i32
    %c0_i32_0 = arith.constant 0 : i32
    %c0_i32_1 = arith.constant 0 : i32
    return %c0_i32, %c0_i32_0 : i32, i32
  }
  func.func @transform_6(%arg0: i32) -> (i32, i32) {
    %c0_i32 = arith.constant 0 : i32
    %c0_i32_0 = arith.constant 0 : i32
    %c0_i32_1 = arith.constant 0 : i32
    return %c0_i32, %c0_i32_0 : i32, i32
  }
  func.func @transform_7(%arg0: i32) -> (i32, i32) {
    %c0_i32 = arith.constant 0 : i32
    %c0_i32_0 = arith.constant 0 : i32
    %c0_i32_1 = arith.constant 0 : i32
    return %c0_i32, %c0_i32_0 : i32, i32
  }
  func.func @transform_8(%arg0: i32) -> (i32, i32) {
    %c0_i32 = arith.constant 0 : i32
    %c0_i32_0 = arith.constant 0 : i32
    %c0_i32_1 = arith.constant 0 : i32
    return %c0_i32, %c0_i32_0 : i32, i32
  }
  func.func @transform_9(%arg0: i32) -> (i32, i32) {
    %c0_i32 = arith.constant 0 : i32
    %c0_i32_0 = arith.constant 0 : i32
    %c0_i32_1 = arith.constant 0 : i32
    return %c0_i32, %c0_i32_0 : i32, i32
  }
  func.func @transform_10(%arg0: i32) -> (i32, i32) {
    %c0_i32 = arith.constant 0 : i32
    %c0_i32_0 = arith.constant 0 : i32
    %c0_i32_1 = arith.constant 0 : i32
    return %c0_i32, %c0_i32_0 : i32, i32
  }
  func.func @transform_11(%arg0: i32) -> (i32, i32) {
    %c0_i32 = arith.constant 0 : i32
    %c0_i32_0 = arith.constant 0 : i32
    %c0_i32_1 = arith.constant 0 : i32
    return %c0_i32, %c0_i32_0 : i32, i32
  }
  func.func @transform_12(%arg0: i32) -> (i32, i32) {
    %c0_i32 = arith.constant 0 : i32
    %c0_i32_0 = arith.constant 0 : i32
    return %arg0, %c0_i32 : i32, i32
  }
}

</mosaic_0001>

<llo_original>
// kernel: tpu_custom_call.1
$region0: #{tpu_custom_call.1}
  #allocation0 [shape = 'u32[]', space=smem, size = 0x4, offset = 0x4, fixed_abs, tag = 'smem constant byte address 0x4 - core index']
  #allocation1 [shape = 'u32[72,128]{1,0:T(1,128)}', space=vmem, size = 0x9000, scoped, tag = 'internal scratch']
  %s0 = inlined_call_operand.hbm [shape: f32[32,128], index: 0, kind: input, shape index: {}]
  %s1 = inlined_call_operand.vmem [shape: f32[128,512], index: 1, kind: input, shape index: {}]
  %s2 = inlined_call_operand.hbm [shape: f32[1,512], index: 2, kind: input, shape index: {}]
  %s3 = inlined_call_operand.hbm [shape: f32[128,512], index: 3, kind: input, shape index: {}]
  %s4 = inlined_call_operand.hbm [shape: f32[1,512], index: 4, kind: input, shape index: {}]
  %s5 = inlined_call_operand.hbm [shape: f32[128,512], index: 5, kind: input, shape index: {}]
  %s6 = inlined_call_operand.hbm [shape: f32[1,512], index: 6, kind: input, shape index: {}]
  %s7 = inlined_call_operand.vmem [shape: f32[512,64], index: 7, kind: input, shape index: {}]
  %s8 = inlined_call_operand.hbm [shape: f32[64,64], index: 8, kind: input, shape index: {}]
  %s9 = inlined_call_operand.vmem [shape: f32[64,512], index: 9, kind: input, shape index: {}]
  %s10 = inlined_call_operand.hbm [shape: f32[512,128], index: 10, kind: input, shape index: {}]
  %s11 = inlined_call_operand.vmem [shape: f32[1,128], index: 11, kind: input, shape index: {}]
  %s12 = inlined_call_operand.hbm [shape: f32[32,128], index: 12, kind: output, shape index: {}]
  %s13 = sld [smem:[#allocation0]]
  $region90: #{tpu_custom_call.1} parent=0
    _
  %s15 = ssub.s32 1, %s13
  %s16 = scalar_select 0, %s15, %s13
  $region1: #{tpu_custom_call.1} parent=0
    #allocation2 [shape = 'u8[16384]{0}', space=vmem, size = 0x4000, scoped, tag = 'input window, operand 0, single buffered']
    #allocation3 [shape = 's32[1]{0}', space=sflag, size = 0x4, scoped, tag = 'scoped memory for tpu_custom_call.1']
    #allocation4 [shape = 's32[1]{0}', space=sflag, size = 0x4, scoped, tag = 'scoped memory for tpu_custom_call.1']
    #allocation5 [shape = 'u8[2048]{0}', space=vmem, size = 0x800, scoped, tag = 'input window, operand 2, single buffered']
    #allocation6 [shape = 's32[1]{0}', space=sflag, size = 0x4, scoped, tag = 'scoped memory for tpu_custom_call.1']
    #allocation7 [shape = 'u8[262144]{0}', space=vmem, size = 0x40000, scoped, tag = 'input window, operand 3, single buffered']
    #allocation8 [shape = 'u8[2048]{0}', space=vmem, size = 0x800, scoped, tag = 'input window, operand 4, single buffered']
    #allocation9 [shape = 's32[1]{0}', space=sflag, size = 0x4, scoped, tag = 'scoped memory for tpu_custom_call.1']
    #allocation10 [shape = 'u8[262144]{0}', space=vmem, size = 0x40000, scoped, tag = 'input window, operand 5, single buffered']
    #allocation11 [shape = 'u8[2048]{0}', space=vmem, size = 0x800, scoped, tag = 'input window, operand 6, single buffered']
    #allocation12 [shape = 's32[1]{0}', space=sflag, size = 0x4, scoped, tag = 'scoped memory for tpu_custom_call.1']
    #allocation13 [shape = 'u8[32768]{0}', space=vmem, size = 0x8000, scoped, tag = 'input window, operand 8, single buffered']
    #allocation14 [shape = 'u8[262144]{0}', space=vmem, size = 0x40000, scoped, tag = 'input window, operand 10, single buffered']
    #allocation15 [shape = 's32[1]{0}', space=sflag, size = 0x4, scoped, tag = 'scoped memory for tpu_custom_call.1']
    #allocation16 [shape = 'u8[16384]{0}', space=vmem, size = 0x4000, scoped, tag = 'output window, operand 0, single buffered']
    %17 = vsyncpa [#allocation3], 0
    %18 = vsyncpa [#allocation6], 0
    %19 = vsyncpa [#allocation9], 0
    %20 = vsyncpa [#allocation12], 0
    %21 = vsyncpa [#allocation15], 0
    %22 = vsyncpa [#allocation4], 0
    // Predicated region
    $region2: #{tpu_custom_call.1} parent=1 // pred_check
      _
    $region3: #{tpu_custom_call.1} parent=1 // pred_check_branch
      %24 = sbr.rel (0) target = $region5
    $region4: #{tpu_custom_call.1} parent=1 // pred_region
      %26 = vsyncadd [#allocation3], 0
      %s27 = sshll.u32 %s0, 4
      %s28 = int_to_ptr.hbm [resolvable:$true] %s27
      %s29 = sshll.u32 [#allocation2], 4
      %s30 = int_to_ptr.vmem [resolvable:$true] %s29
      %35 = dma.hbm_to_vmem [thread:$0]  %s28, 512, %s30, [#allocation3], 128, 128, 8
    $region5: #{tpu_custom_call.1} parent=1 // pred_fallthru
      _
    // Predicated region
    $region6: #{tpu_custom_call.1} parent=1 // pred_check
      _
    $region7: #{tpu_custom_call.1} parent=1 // pred_check_branch
      %37 = sbr.rel (0) target = $region9
    $region8: #{tpu_custom_call.1} parent=1 // pred_region
      _
    $region9: #{tpu_custom_call.1} parent=1 // pred_fallthru
      _
    // Predicated region
    $region10: #{tpu_custom_call.1} parent=1 // pred_check
      _
    $region11: #{tpu_custom_call.1} parent=1 // pred_check_branch
      %39 = sbr.rel (0) target = $region13
    $region12: #{tpu_custom_call.1} parent=1 // pred_region
      %41 = vsyncadd [#allocation6], 0
      %s43 = sshll.u32 %s2, 4
      %s44 = int_to_ptr.hbm [resolvable:$true] %s43
      %s45 = sshll.u32 [#allocation5], 4
      %s46 = int_to_ptr.vmem [resolvable:$true] %s45
      %48 = dma.hbm_to_vmem [thread:$0]  %s44, 64, %s46, [#allocation6]
    $region13: #{tpu_custom_call.1} parent=1 // pred_fallthru
      _
    // Predicated region
    $region14: #{tpu_custom_call.1} parent=1 // pred_check
      _
    $region15: #{tpu_custom_call.1} parent=1 // pred_check_branch
      %50 = sbr.rel (0) target = $region17
    $region16: #{tpu_custom_call.1} parent=1 // pred_region
      %52 = vsyncadd [#allocation6], 0
      %s53 = sshll.u32 %s3, 4
      %s54 = int_to_ptr.hbm [resolvable:$true] %s53
      %s55 = sshll.u32 [#allocation7], 4
      %s56 = int_to_ptr.vmem [resolvable:$true] %s55
      %61 = dma.hbm_to_vmem [thread:$0]  %s54, 8192, %s56, [#allocation6], 512, 512, 32
    $region17: #{tpu_custom_call.1} parent=1 // pred_fallthru
      _
    // Predicated region
    $region18: #{tpu_custom_call.1} parent=1 // pred_check
      _
    $region19: #{tpu_custom_call.1} parent=1 // pred_check_branch
      %63 = sbr.rel (0) target = $region21
    $region20: #{tpu_custom_call.1} parent=1 // pred_region
      %65 = vsyncadd [#allocation9], 0
      %s67 = sshll.u32 %s4, 4
      %s68 = int_to_ptr.hbm [resolvable:$true] %s67
      %s69 = sshll.u32 [#allocation8], 4
      %s70 = int_to_ptr.vmem [resolvable:$true] %s69
      %72 = dma.hbm_to_vmem [thread:$0]  %s68, 64, %s70, [#allocation9]
    $region21: #{tpu_custom_call.1} parent=1 // pred_fallthru
      _
    // Predicated region
    $region22: #{tpu_custom_call.1} parent=1 // pred_check
      _
    $region23: #{tpu_custom_call.1} parent=1 // pred_check_branch
      %74 = sbr.rel (0) target = $region25
    $region24: #{tpu_custom_call.1} parent=1 // pred_region
      %76 = vsyncadd [#allocation9], 0
      %s77 = sshll.u32 %s5, 4
      %s78 = int_to_ptr.hbm [resolvable:$true] %s77
      %s79 = sshll.u32 [#allocation10], 4
      %s80 = int_to_ptr.vmem [resolvable:$true] %s79
      %85 = dma.hbm_to_vmem [thread:$0]  %s78, 8192, %s80, [#allocation9], 512, 512, 32
    $region25: #{tpu_custom_call.1} parent=1 // pred_fallthru
      _
    // Predicated region
    $region26: #{tpu_custom_call.1} parent=1 // pred_check
      _
    $region27: #{tpu_custom_call.1} parent=1 // pred_check_branch
      %87 = sbr.rel (0) target = $region29
    $region28: #{tpu_custom_call.1} parent=1 // pred_region
      %89 = vsyncadd [#allocation12], 0
      %s91 = sshll.u32 %s6, 4
      %s92 = int_to_ptr.hbm [resolvable:$true] %s91
      %s93 = sshll.u32 [#allocation11], 4
      %s94 = int_to_ptr.vmem [resolvable:$true] %s93
      %96 = dma.hbm_to_vmem [thread:$0]  %s92, 64, %s94, [#allocation12]
    $region29: #{tpu_custom_call.1} parent=1 // pred_fallthru
      _
    // Predicated region
    $region30: #{tpu_custom_call.1} parent=1 // pred_check
      _
    $region31: #{tpu_custom_call.1} parent=1 // pred_check_branch
      %98 = sbr.rel (0) target = $region33
    $region32: #{tpu_custom_call.1} parent=1 // pred_region
      _
    $region33: #{tpu_custom_call.1} parent=1 // pred_fallthru
      _
    // Predicated region
    $region34: #{tpu_custom_call.1} parent=1 // pred_check
      _
    $region35: #{tpu_custom_call.1} parent=1 // pred_check_branch
      %100 = sbr.rel (0) target = $region37
    $region36: #{tpu_custom_call.1} parent=1 // pred_region
      %102 = vsyncadd [#allocation12], 0
      %s103 = sshll.u32 %s8, 4
      %s104 = int_to_ptr.hbm [resolvable:$true] %s103
      %s105 = sshll.u32 [#allocation13], 4
      %s106 = int_to_ptr.vmem [resolvable:$true] %s105
      %111 = dma.hbm_to_vmem [thread:$0]  %s104, 1024, %s106, [#allocation12], 128, 128, 8
    $region37: #{tpu_custom_call.1} parent=1 // pred_fallthru
      _
    // Predicated region
    $region38: #{tpu_custom_call.1} parent=1 // pred_check
      _
    $region39: #{tpu_custom_call.1} parent=1 // pred_check_branch
      %113 = sbr.rel (0) target = $region41
    $region40: #{tpu_custom_call.1} parent=1 // pred_region
      _
    $region41: #{tpu_custom_call.1} parent=1 // pred_fallthru
      _
    // Predicated region
    $region42: #{tpu_custom_call.1} parent=1 // pred_check
      _
    $region43: #{tpu_custom_call.1} parent=1 // pred_check_branch
      %115 = sbr.rel (0) target = $region45
    $region44: #{tpu_custom_call.1} parent=1 // pred_region
      %117 = vsyncadd [#allocation15], 0
      %s118 = sshll.u32 %s10, 4
      %s119 = int_to_ptr.hbm [resolvable:$true] %s118
      %s120 = sshll.u32 [#allocation14], 4
      %s121 = int_to_ptr.vmem [resolvable:$true] %s120
      %126 = dma.hbm_to_vmem [thread:$0]  %s119, 8192, %s121, [#allocation15], 128, 128, 8
    $region45: #{tpu_custom_call.1} parent=1 // pred_fallthru
      _
    // Predicated region
    $region46: #{tpu_custom_call.1} parent=1 // pred_check
      _
    $region47: #{tpu_custom_call.1} parent=1 // pred_check_branch
      %128 = sbr.rel (0) target = $region49
    $region48: #{tpu_custom_call.1} parent=1 // pred_region
      _
    $region49: #{tpu_custom_call.1} parent=1 // pred_fallthru
      _
    // Predicated region
    $region50: #{tpu_custom_call.1} parent=1 // pred_check
      _
    $region51: #{tpu_custom_call.1} parent=1 // pred_check_branch
      %130 = sbr.rel (0) target = $region53
    $region52: #{tpu_custom_call.1} parent=1 // pred_region
      %132 = dma.done [#allocation3], 512
    $region53: #{tpu_custom_call.1} parent=1 // pred_fallthru
      _
    // Predicated region
    $region54: #{tpu_custom_call.1} parent=1 // pred_check
      _
    $region55: #{tpu_custom_call.1} parent=1 // pred_check_branch
      %134 = sbr.rel (0) target = $region57
    $region56: #{tpu_custom_call.1} parent=1 // pred_region
      %136 = dma.done [#allocation6], 64
    $region57: #{tpu_custom_call.1} parent=1 // pred_fallthru
      _
    // Predicated region
    $region58: #{tpu_custom_call.1} parent=1 // pred_check
      _
    $region59: #{tpu_custom_call.1} parent=1 // pred_check_branch
      %138 = sbr.rel (0) target = $region61
    $region60: #{tpu_custom_call.1} parent=1 // pred_region
      %140 = dma.done [#allocation6], 8192
    $region61: #{tpu_custom_call.1} parent=1 // pred_fallthru
      _
    // Predicated region
    $region62: #{tpu_custom_call.1} parent=1 // pred_check
      _
    $region63: #{tpu_custom_call.1} parent=1 // pred_check_branch
      %142 = sbr.rel (0) target = $region65
    $region64: #{tpu_custom_call.1} parent=1 // pred_region
      %144 = dma.done [#allocation9], 64
    $region65: #{tpu_custom_call.1} parent=1 // pred_fallthru
      _
    // Predicated region
    $region66: #{tpu_custom_call.1} parent=1 // pred_check
      _
    $region67: #{tpu_custom_call.1} parent=1 // pred_check_branch
      %146 = sbr.rel (0) target = $region69
    $region68: #{tpu_custom_call.1} parent=1 // pred_region
      %148 = dma.done [#allocation9], 8192
    $region69: #{tpu_custom_call.1} parent=1 // pred_fallthru
      _
    // Predicated region
    $region70: #{tpu_custom_call.1} parent=1 // pred_check
      _
    $region71: #{tpu_custom_call.1} parent=1 // pred_check_branch
      %150 = sbr.rel (0) target = $region73
    $region72: #{tpu_custom_call.1} parent=1 // pred_region
      %152 = dma.done [#allocation12], 64
    $region73: #{tpu_custom_call.1} parent=1 // pred_fallthru
      _
    // Predicated region
    $region74: #{tpu_custom_call.1} parent=1 // pred_check
      _
    $region75: #{tpu_custom_call.1} parent=1 // pred_check_branch
      %154 = sbr.rel (0) target = $region77
    $region76: #{tpu_custom_call.1} parent=1 // pred_region
      %156 = dma.done [#allocation12], 1024
    $region77: #{tpu_custom_call.1} parent=1 // pred_fallthru
      _
    // Predicated region
    $region78: #{tpu_custom_call.1} parent=1 // pred_check
      _
    $region79: #{tpu_custom_call.1} parent=1 // pred_check_branch
      %158 = sbr.rel (0) target = $region81
    $region80: #{tpu_custom_call.1} parent=1 // pred_region
      %160 = dma.done [#allocation15], 8192
    $region81: #{tpu_custom_call.1} parent=1 // pred_fallthru
      _
    %v161 = vld [vmem:[#allocation2] sm:$0xff]
    %v162 = vld [vmem:[#allocation2 + $0x8] sm:$0xff]
    %v163 = vld [vmem:[#allocation2 + $0x10] sm:$0xff]
    %v164 = vld [vmem:[#allocation2 + $0x18] sm:$0xff]
    %v165 = vld [vmem:[%s1] sm:$0xff]
    %v166 = vld [vmem:[%s1 + $0x8] sm:$0xff]
    %v167 = vld [vmem:[%s1 + $0x10] sm:$0xff]
    %v168 = vld [vmem:[%s1 + $0x18] sm:$0xff]
    %v169 = vld [vmem:[%s1 + $0x20] sm:$0xff]
    %v170 = vld [vmem:[%s1 + $0x28] sm:$0xff]
    %v171 = vld [vmem:[%s1 + $0x30] sm:$0xff]
    %v172 = vld [vmem:[%s1 + $0x38] sm:$0xff]
    %v173 = vld [vmem:[%s1 + $0x40] sm:$0xff]
    %v174 = vld [vmem:[%s1 + $0x48] sm:$0xff]
    %v175 = vld [vmem:[%s1 + $0x50] sm:$0xff]
    %v176 = vld [vmem:[%s1 + $0x58] sm:$0xff]
    %v177 = vld [vmem:[%s1 + $0x60] sm:$0xff]
    %v178 = vld [vmem:[%s1 + $0x68] sm:$0xff]
    %v179 = vld [vmem:[%s1 + $0x70] sm:$0xff]
    %v180 = vld [vmem:[%s1 + $0x78] sm:$0xff]
    %v181 = vld [vmem:[%s1 + $0x80] sm:$0xff]
    %v182 = vld [vmem:[%s1 + $0x88] sm:$0xff]
    %v183 = vld [vmem:[%s1 + $0x90] sm:$0xff]
    %v184 = vld [vmem:[%s1 + $0x98] sm:$0xff]
    %v185 = vld [vmem:[%s1 + $0xa0] sm:$0xff]
    %v186 = vld [vmem:[%s1 + $0xa8] sm:$0xff]
    %v187 = vld [vmem:[%s1 + $0xb0] sm:$0xff]
    %v188 = vld [vmem:[%s1 + $0xb8] sm:$0xff]
    %v189 = vld [vmem:[%s1 + $0xc0] sm:$0xff]
    %v190 = vld [vmem:[%s1 + $0xc8] sm:$0xff]
    %v191 = vld [vmem:[%s1 + $0xd0] sm:$0xff]
    %v192 = vld [vmem:[%s1 + $0xd8] sm:$0xff]
    %v193 = vld [vmem:[%s1 + $0xe0] sm:$0xff]
    %v194 = vld [vmem:[%s1 + $0xe8] sm:$0xff]
    %v195 = vld [vmem:[%s1 + $0xf0] sm:$0xff]
    %v196 = vld [vmem:[%s1 + $0xf8] sm:$0xff]
    %v197 = vld [vmem:[%s1 + $0x100] sm:$0xff]
    %v198 = vld [vmem:[%s1 + $0x108] sm:$0xff]
    %v199 = vld [vmem:[%s1 + $0x110] sm:$0xff]
    %v200 = vld [vmem:[%s1 + $0x118] sm:$0xff]
    %v201 = vld [vmem:[%s1 + $0x120] sm:$0xff]
    %v202 = vld [vmem:[%s1 + $0x128] sm:$0xff]
    %v203 = vld [vmem:[%s1 + $0x130] sm:$0xff]
    %v204 = vld [vmem:[%s1 + $0x138] sm:$0xff]
    %v205 = vld [vmem:[%s1 + $0x140] sm:$0xff]
    %v206 = vld [vmem:[%s1 + $0x148] sm:$0xff]
    %v207 = vld [vmem:[%s1 + $0x150] sm:$0xff]
    %v208 = vld [vmem:[%s1 + $0x158] sm:$0xff]
    %v209 = vld [vmem:[%s1 + $0x160] sm:$0xff]
    %v210 = vld [vmem:[%s1 + $0x168] sm:$0xff]
    %v211 = vld [vmem:[%s1 + $0x170] sm:$0xff]
    %v212 = vld [vmem:[%s1 + $0x178] sm:$0xff]
    %v213 = vld [vmem:[%s1 + $0x180] sm:$0xff]
    %v214 = vld [vmem:[%s1 + $0x188] sm:$0xff]
    %v215 = vld [vmem:[%s1 + $0x190] sm:$0xff]
    %v216 = vld [vmem:[%s1 + $0x198] sm:$0xff]
    %v217 = vld [vmem:[%s1 + $0x1a0] sm:$0xff]
    %v218 = vld [vmem:[%s1 + $0x1a8] sm:$0xff]
    %v219 = vld [vmem:[%s1 + $0x1b0] sm:$0xff]
    %v220 = vld [vmem:[%s1 + $0x1b8] sm:$0xff]
    %v221 = vld [vmem:[%s1 + $0x1c0] sm:$0xff]
    %v222 = vld [vmem:[%s1 + $0x1c8] sm:$0xff]
    %v223 = vld [vmem:[%s1 + $0x1d0] sm:$0xff]
    %v224 = vld [vmem:[%s1 + $0x1d8] sm:$0xff]
    %v225 = vld [vmem:[%s1 + $0x1e0] sm:$0xff]
    %v226 = vld [vmem:[%s1 + $0x1e8] sm:$0xff]
    %v227 = vld [vmem:[%s1 + $0x1f0] sm:$0xff]
    %v228 = vld [vmem:[%s1 + $0x1f8] sm:$0xff]
    %v229 = vld [vmem:[#allocation5] sm:$0xf]
    %v231 = vperm.slane %v229, 0
    %v232 = vperm.slane %v229, 1
    %v233 = vperm.slane %v229, 2
    %v234 = vperm.slane %v229, 3
    %239 = vmatpush.msra.mxu0 %v225
    %240 = vmatpush.msra.mxu0 %v221
    %241 = vmatpush.msra.mxu0 %v217
    %242 = vmatpush.msra.mxu0 %v213
    %243 = vmatpush.msra.mxu0 %v209
    %244 = vmatpush.msra.mxu0 %v205
    %245 = vmatpush.msra.mxu0 %v201
    %246 = vmatpush.msra.mxu0 %v197
    %247 = vmatpush.msra.mxu0 %v193
    %248 = vmatpush.msra.mxu0 %v189
    %249 = vmatpush.msra.mxu0 %v185
    %250 = vmatpush.msra.mxu0 %v181
    %251 = vmatpush.msra.mxu0 %v177
    %252 = vmatpush.msra.mxu0 %v173
    %253 = vmatpush.msra.mxu0 %v169
    %254 = vmatpush.msra.mxu0 %v165
    %255 = vmatmul.f32.gmra.mxu0 %v161
    %v256 = vpop.f32.mrf.mxu0
    %v257 = vadd.f32 %v231, %v256
    %258 = vmatmul.f32.gmra.mxu0 %v162
    %v259 = vpop.f32.mrf.mxu0
    %v260 = vadd.f32 %v231, %v259
    %261 = vmatmul.f32.gmra.mxu0 %v163
    %v262 = vpop.f32.mrf.mxu0
    %v263 = vadd.f32 %v231, %v262
    %264 = vmatmul.f32.gmra.mxu0 %v164
    %v265 = vpop.f32.mrf.mxu0
    %v266 = vadd.f32 %v231, %v265
    %267 = vdwg.mxu0
    %268 = vmatpush.msra.mxu0 %v226
    %269 = vmatpush.msra.mxu0 %v222
    %270 = vmatpush.msra.mxu0 %v218
    %271 = vmatpush.msra.mxu0 %v214
    %272 = vmatpush.msra.mxu0 %v210
    %273 = vmatpush.msra.mxu0 %v206
    %274 = vmatpush.msra.mxu0 %v202
    %275 = vmatpush.msra.mxu0 %v198
    %276 = vmatpush.msra.mxu0 %v194
    %277 = vmatpush.msra.mxu0 %v190
    %278 = vmatpush.msra.mxu0 %v186
    %279 = vmatpush.msra.mxu0 %v182
    %280 = vmatpush.msra.mxu0 %v178
    %281 = vmatpush.msra.mxu0 %v174
    %282 = vmatpush.msra.mxu0 %v170
    %283 = vmatpush.msra.mxu0 %v166
    %284 = vmatmul.f32.gmra.mxu0 %v161
    %v285 = vpop.f32.mrf.mxu0
    %v286 = vadd.f32 %v232, %v285
    %287 = vmatmul.f32.gmra.mxu0 %v162
    %v288 = vpop.f32.mrf.mxu0
    %v289 = vadd.f32 %v232, %v288
    %290 = vmatmul.f32.gmra.mxu0 %v163
    %v291 = vpop.f32.mrf.mxu0
    %v292 = vadd.f32 %v232, %v291
    %293 = vmatmul.f32.gmra.mxu0 %v164
    %v294 = vpop.f32.mrf.mxu0
    %v295 = vadd.f32 %v232, %v294
    %296 = vdwg.mxu0
    %297 = vmatpush.msra.mxu0 %v227
    %298 = vmatpush.msra.mxu0 %v223
    %299 = vmatpush.msra.mxu0 %v219
    %300 = vmatpush.msra.mxu0 %v215
    %301 = vmatpush.msra.mxu0 %v211
    %302 = vmatpush.msra.mxu0 %v207
    %303 = vmatpush.msra.mxu0 %v203
    %304 = vmatpush.msra.mxu0 %v199
    %305 = vmatpush.msra.mxu0 %v195
    %306 = vmatpush.msra.mxu0 %v191
    %307 = vmatpush.msra.mxu0 %v187
    %308 = vmatpush.msra.mxu0 %v183
    %309 = vmatpush.msra.mxu0 %v179
    %310 = vmatpush.msra.mxu0 %v175
    %311 = vmatpush.msra.mxu0 %v171
    %312 = vmatpush.msra.mxu0 %v167
    %313 = vmatmul.f32.gmra.mxu0 %v161
    %v314 = vpop.f32.mrf.mxu0
    %v315 = vadd.f32 %v233, %v314
    %316 = vmatmul.f32.gmra.mxu0 %v162
    %v317 = vpop.f32.mrf.mxu0
    %v318 = vadd.f32 %v233, %v317
    %319 = vmatmul.f32.gmra.mxu0 %v163
    %v320 = vpop.f32.mrf.mxu0
    %v321 = vadd.f32 %v233, %v320
    %322 = vmatmul.f32.gmra.mxu0 %v164
    %v323 = vpop.f32.mrf.mxu0
    %v324 = vadd.f32 %v233, %v323
    %325 = vdwg.mxu0
    %326 = vmatpush.msra.mxu0 %v228
    %327 = vmatpush.msra.mxu0 %v224
    %328 = vmatpush.msra.mxu0 %v220
    %329 = vmatpush.msra.mxu0 %v216
    %330 = vmatpush.msra.mxu0 %v212
    %331 = vmatpush.msra.mxu0 %v208
    %332 = vmatpush.msra.mxu0 %v204
    %333 = vmatpush.msra.mxu0 %v200
    %334 = vmatpush.msra.mxu0 %v196
    %335 = vmatpush.msra.mxu0 %v192
    %336 = vmatpush.msra.mxu0 %v188
    %337 = vmatpush.msra.mxu0 %v184
    %338 = vmatpush.msra.mxu0 %v180
    %339 = vmatpush.msra.mxu0 %v176
    %340 = vmatpush.msra.mxu0 %v172
    %341 = vmatpush.msra.mxu0 %v168
    %342 = vmatmul.f32.gmra.mxu0 %v161
    %v343 = vpop.f32.mrf.mxu0
    %v344 = vadd.f32 %v234, %v343
    %345 = vmatmul.f32.gmra.mxu0 %v162
    %v346 = vpop.f32.mrf.mxu0
    %v347 = vadd.f32 %v234, %v346
    %348 = vmatmul.f32.gmra.mxu0 %v163
    %v349 = vpop.f32.mrf.mxu0
    %v350 = vadd.f32 %v234, %v349
    %351 = vmatmul.f32.gmra.mxu0 %v164
    %v352 = vpop.f32.mrf.mxu0
    %v353 = vadd.f32 %v234, %v352
    %354 = vdwg.mxu0
    %v355 = vld [vmem:[#allocation7] sm:$0xff]
    %v356 = vld [vmem:[#allocation7 + $0x8] sm:$0xff]
    %v357 = vld [vmem:[#allocation7 + $0x10] sm:$0xff]
    %v358 = vld [vmem:[#allocation7 + $0x18] sm:$0xff]
    %v359 = vld [vmem:[#allocation7 + $0x20] sm:$0xff]
    %v360 = vld [vmem:[#allocation7 + $0x28] sm:$0xff]
    %v361 = vld [vmem:[#allocation7 + $0x30] sm:$0xff]
    %v362 = vld [vmem:[#allocation7 + $0x38] sm:$0xff]
    %v363 = vld [vmem:[#allocation7 + $0x40] sm:$0xff]
    %v364 = vld [vmem:[#allocation7 + $0x48] sm:$0xff]
    %v365 = vld [vmem:[#allocation7 + $0x50] sm:$0xff]
    %v366 = vld [vmem:[#allocation7 + $0x58] sm:$0xff]
    %v367 = vld [vmem:[#allocation7 + $0x60] sm:$0xff]
    %v368 = vld [vmem:[#allocation7 + $0x68] sm:$0xff]
    %v369 = vld [vmem:[#allocation7 + $0x70] sm:$0xff]
    %v370 = vld [vmem:[#allocation7 + $0x78] sm:$0xff]
    %v371 = vld [vmem:[#allocation7 + $0x80] sm:$0xff]
    %v372 = vld [vmem:[#allocation7 + $0x88] sm:$0xff]
    %v373 = vld [vmem:[#allocation7 + $0x90] sm:$0xff]
    %v374 = vld [vmem:[#allocation7 + $0x98] sm:$0xff]
    %v375 = vld [vmem:[#allocation7 + $0xa0] sm:$0xff]
    %v376 = vld [vmem:[#allocation7 + $0xa8] sm:$0xff]
    %v377 = vld [vmem:[#allocation7 + $0xb0] sm:$0xff]
    %v378 = vld [vmem:[#allocation7 + $0xb8] sm:$0xff]
    %v379 = vld [vmem:[#allocation7 + $0xc0] sm:$0xff]
    %v380 = vld [vmem:[#allocation7 + $0xc8] sm:$0xff]
    %v381 = vld [vmem:[#allocation7 + $0xd0] sm:$0xff]
    %v382 = vld [vmem:[#allocation7 + $0xd8] sm:$0xff]
    %v383 = vld [vmem:[#allocation7 + $0xe0] sm:$0xff]
    %v384 = vld [vmem:[#allocation7 + $0xe8] sm:$0xff]
    %v385 = vld [vmem:[#allocation7 + $0xf0] sm:$0xff]
    %v386 = vld [vmem:[#allocation7 + $0xf8] sm:$0xff]
    %v387 = vld [vmem:[#allocation7 + $0x100] sm:$0xff]
    %v388 = vld [vmem:[#allocation7 + $0x108] sm:$0xff]
    %v389 = vld [vmem:[#allocation7 + $0x110] sm:$0xff]
    %v390 = vld [vmem:[#allocation7 + $0x118] sm:$0xff]
    %v391 = vld [vmem:[#allocation7 + $0x120] sm:$0xff]
    %v392 = vld [vmem:[#allocation7 + $0x128] sm:$0xff]
    %v393 = vld [vmem:[#allocation7 + $0x130] sm:$0xff]
    %v394 = vld [vmem:[#allocation7 + $0x138] sm:$0xff]
    %v395 = vld [vmem:[#allocation7 + $0x140] sm:$0xff]
    %v396 = vld [vmem:[#allocation7 + $0x148] sm:$0xff]
    %v397 = vld [vmem:[#allocation7 + $0x150] sm:$0xff]
    %v398 = vld [vmem:[#allocation7 + $0x158] sm:$0xff]
    %v399 = vld [vmem:[#allocation7 + $0x160] sm:$0xff]
    %v400 = vld [vmem:[#allocation7 + $0x168] sm:$0xff]
    %v401 = vld [vmem:[#allocation7 + $0x170] sm:$0xff]
    %v402 = vld [vmem:[#allocation7 + $0x178] sm:$0xff]
    %v403 = vld [vmem:[#allocation7 + $0x180] sm:$0xff]
    %v404 = vld [vmem:[#allocation7 + $0x188] sm:$0xff]
    %v405 = vld [vmem:[#allocation7 + $0x190] sm:$0xff]
    %v406 = vld [vmem:[#allocation7 + $0x198] sm:$0xff]
    %v407 = vld [vmem:[#allocation7 + $0x1a0] sm:$0xff]
    %v408 = vld [vmem:[#allocation7 + $0x1a8] sm:$0xff]
    %v409 = vld [vmem:[#allocation7 + $0x1b0] sm:$0xff]
    %v410 = vld [vmem:[#allocation7 + $0x1b8] sm:$0xff]
    %v411 = vld [vmem:[#allocation7 + $0x1c0] sm:$0xff]
    %v412 = vld [vmem:[#allocation7 + $0x1c8] sm:$0xff]
    %v413 = vld [vmem:[#allocation7 + $0x1d0] sm:$0xff]
    %v414 = vld [vmem:[#allocation7 + $0x1d8] sm:$0xff]
    %v415 = vld [vmem:[#allocation7 + $0x1e0] sm:$0xff]
    %v416 = vld [vmem:[#allocation7 + $0x1e8] sm:$0xff]
    %v417 = vld [vmem:[#allocation7 + $0x1f0] sm:$0xff]
    %v418 = vld [vmem:[#allocation7 + $0x1f8] sm:$0xff]
    %v419 = vld [vmem:[#allocation8] sm:$0xf]
    %v421 = vperm.slane %v419, 0
    %v422 = vperm.slane %v419, 1
    %v423 = vperm.slane %v419, 2
    %v424 = vperm.slane %v419, 3
    %429 = vmatpush.msra.mxu0 %v415
    %430 = vmatpush.msra.mxu0 %v411
    %431 = vmatpush.msra.mxu0 %v407
    %432 = vmatpush.msra.mxu0 %v403
    %433 = vmatpush.msra.mxu0 %v399
    %434 = vmatpush.msra.mxu0 %v395
    %435 = vmatpush.msra.mxu0 %v391
    %436 = vmatpush.msra.mxu0 %v387
    %437 = vmatpush.msra.mxu0 %v383
    %438 = vmatpush.msra.mxu0 %v379
    %439 = vmatpush.msra.mxu0 %v375
    %440 = vmatpush.msra.mxu0 %v371
    %441 = vmatpush.msra.mxu0 %v367
    %442 = vmatpush.msra.mxu0 %v363
    %443 = vmatpush.msra.mxu0 %v359
    %444 = vmatpush.msra.mxu0 %v355
    %445 = vmatmul.f32.gmra.mxu0 %v161
    %v446 = vpop.f32.mrf.mxu0
    %v447 = vadd.f32 %v421, %v446
    %448 = vmatmul.f32.gmra.mxu0 %v162
    %v449 = vpop.f32.mrf.mxu0
    %v450 = vadd.f32 %v421, %v449
    %451 = vmatmul.f32.gmra.mxu0 %v163
    %v452 = vpop.f32.mrf.mxu0
    %v453 = vadd.f32 %v421, %v452
    %454 = vmatmul.f32.gmra.mxu0 %v164
    %v455 = vpop.f32.mrf.mxu0
    %v456 = vadd.f32 %v421, %v455
    %457 = vdwg.mxu0
    %458 = vmatpush.msra.mxu0 %v416
    %459 = vmatpush.msra.mxu0 %v412
    %460 = vmatpush.msra.mxu0 %v408
    %461 = vmatpush.msra.mxu0 %v404
    %462 = vmatpush.msra.mxu0 %v400
    %463 = vmatpush.msra.mxu0 %v396
    %464 = vmatpush.msra.mxu0 %v392
    %465 = vmatpush.msra.mxu0 %v388
    %466 = vmatpush.msra.mxu0 %v384
    %467 = vmatpush.msra.mxu0 %v380
    %468 = vmatpush.msra.mxu0 %v376
    %469 = vmatpush.msra.mxu0 %v372
    %470 = vmatpush.msra.mxu0 %v368
    %471 = vmatpush.msra.mxu0 %v364
    %472 = vmatpush.msra.mxu0 %v360
    %473 = vmatpush.msra.mxu0 %v356
    %474 = vmatmul.f32.gmra.mxu0 %v161
    %v475 = vpop.f32.mrf.mxu0
    %v476 = vadd.f32 %v422, %v475
    %477 = vmatmul.f32.gmra.mxu0 %v162
    %v478 = vpop.f32.mrf.mxu0
    %v479 = vadd.f32 %v422, %v478
    %480 = vmatmul.f32.gmra.mxu0 %v163
    %v481 = vpop.f32.mrf.mxu0
    %v482 = vadd.f32 %v422, %v481
    %483 = vmatmul.f32.gmra.mxu0 %v164
    %v484 = vpop.f32.mrf.mxu0
    %v485 = vadd.f32 %v422, %v484
    %486 = vdwg.mxu0
    %487 = vmatpush.msra.mxu0 %v417
    %488 = vmatpush.msra.mxu0 %v413
    %489 = vmatpush.msra.mxu0 %v409
    %490 = vmatpush.msra.mxu0 %v405
    %491 = vmatpush.msra.mxu0 %v401
    %492 = vmatpush.msra.mxu0 %v397
    %493 = vmatpush.msra.mxu0 %v393
    %494 = vmatpush.msra.mxu0 %v389
    %495 = vmatpush.msra.mxu0 %v385
    %496 = vmatpush.msra.mxu0 %v381
    %497 = vmatpush.msra.mxu0 %v377
    %498 = vmatpush.msra.mxu0 %v373
    %499 = vmatpush.msra.mxu0 %v369
    %500 = vmatpush.msra.mxu0 %v365
    %501 = vmatpush.msra.mxu0 %v361
    %502 = vmatpush.msra.mxu0 %v357
    %503 = vmatmul.f32.gmra.mxu0 %v161
    %v504 = vpop.f32.mrf.mxu0
    %v505 = vadd.f32 %v423, %v504
    %506 = vmatmul.f32.gmra.mxu0 %v162
    %v507 = vpop.f32.mrf.mxu0
    %v508 = vadd.f32 %v423, %v507
    %509 = vmatmul.f32.gmra.mxu0 %v163
    %v510 = vpop.f32.mrf.mxu0
    %v511 = vadd.f32 %v423, %v510
    %512 = vmatmul.f32.gmra.mxu0 %v164
    %v513 = vpop.f32.mrf.mxu0
    %v514 = vadd.f32 %v423, %v513
    %515 = vdwg.mxu0
    %516 = vmatpush.msra.mxu0 %v418
    %517 = vmatpush.msra.mxu0 %v414
    %518 = vmatpush.msra.mxu0 %v410
    %519 = vmatpush.msra.mxu0 %v406
    %520 = vmatpush.msra.mxu0 %v402
    %521 = vmatpush.msra.mxu0 %v398
    %522 = vmatpush.msra.mxu0 %v394
    %523 = vmatpush.msra.mxu0 %v390
    %524 = vmatpush.msra.mxu0 %v386
    %525 = vmatpush.msra.mxu0 %v382
    %526 = vmatpush.msra.mxu0 %v378
    %527 = vmatpush.msra.mxu0 %v374
    %528 = vmatpush.msra.mxu0 %v370
    %529 = vmatpush.msra.mxu0 %v366
    %530 = vmatpush.msra.mxu0 %v362
    %531 = vmatpush.msra.mxu0 %v358
    %532 = vmatmul.f32.gmra.mxu0 %v161
    %v533 = vpop.f32.mrf.mxu0
    %v534 = vadd.f32 %v424, %v533
    %535 = vmatmul.f32.gmra.mxu0 %v162
    %v536 = vpop.f32.mrf.mxu0
    %v537 = vadd.f32 %v424, %v536
    %538 = vmatmul.f32.gmra.mxu0 %v163
    %v539 = vpop.f32.mrf.mxu0
    %v540 = vadd.f32 %v424, %v539
    %541 = vmatmul.f32.gmra.mxu0 %v164
    %v542 = vpop.f32.mrf.mxu0
    %v543 = vadd.f32 %v424, %v542
    %544 = vdwg.mxu0
    %v545 = vld [vmem:[#allocation10] sm:$0xff]
    %v546 = vld [vmem:[#allocation10 + $0x8] sm:$0xff]
    %v547 = vld [vmem:[#allocation10 + $0x10] sm:$0xff]
    %v548 = vld [vmem:[#allocation10 + $0x18] sm:$0xff]
    %v549 = vld [vmem:[#allocation10 + $0x20] sm:$0xff]
    %v550 = vld [vmem:[#allocation10 + $0x28] sm:$0xff]
    %v551 = vld [vmem:[#allocation10 + $0x30] sm:$0xff]
    %v552 = vld [vmem:[#allocation10 + $0x38] sm:$0xff]
    %v553 = vld [vmem:[#allocation10 + $0x40] sm:$0xff]
    %v554 = vld [vmem:[#allocation10 + $0x48] sm:$0xff]
    %v555 = vld [vmem:[#allocation10 + $0x50] sm:$0xff]
    %v556 = vld [vmem:[#allocation10 + $0x58] sm:$0xff]
    %v557 = vld [vmem:[#allocation10 + $0x60] sm:$0xff]
    %v558 = vld [vmem:[#allocation10 + $0x68] sm:$0xff]
    %v559 = vld [vmem:[#allocation10 + $0x70] sm:$0xff]
    %v560 = vld [vmem:[#allocation10 + $0x78] sm:$0xff]
    %v561 = vld [vmem:[#allocation10 + $0x80] sm:$0xff]
    %v562 = vld [vmem:[#allocation10 + $0x88] sm:$0xff]
    %v563 = vld [vmem:[#allocation10 + $0x90] sm:$0xff]
    %v564 = vld [vmem:[#allocation10 + $0x98] sm:$0xff]
    %v565 = vld [vmem:[#allocation10 + $0xa0] sm:$0xff]
    %v566 = vld [vmem:[#allocation10 + $0xa8] sm:$0xff]
    %v567 = vld [vmem:[#allocation10 + $0xb0] sm:$0xff]
    %v568 = vld [vmem:[#allocation10 + $0xb8] sm:$0xff]
    %v569 = vld [vmem:[#allocation10 + $0xc0] sm:$0xff]
    %v570 = vld [vmem:[#allocation10 + $0xc8] sm:$0xff]
    %v571 = vld [vmem:[#allocation10 + $0xd0] sm:$0xff]
    %v572 = vld [vmem:[#allocation10 + $0xd8] sm:$0xff]
    %v573 = vld [vmem:[#allocation10 + $0xe0] sm:$0xff]
    %v574 = vld [vmem:[#allocation10 + $0xe8] sm:$0xff]
    %v575 = vld [vmem:[#allocation10 + $0xf0] sm:$0xff]
    %v576 = vld [vmem:[#allocation10 + $0xf8] sm:$0xff]
    %v577 = vld [vmem:[#allocation10 + $0x100] sm:$0xff]
    %v578 = vld [vmem:[#allocation10 + $0x108] sm:$0xff]
    %v579 = vld [vmem:[#allocation10 + $0x110] sm:$0xff]
    %v580 = vld [vmem:[#allocation10 + $0x118] sm:$0xff]
    %v581 = vld [vmem:[#allocation10 + $0x120] sm:$0xff]
    %v582 = vld [vmem:[#allocation10 + $0x128] sm:$0xff]
    %v583 = vld [vmem:[#allocation10 + $0x130] sm:$0xff]
    %v584 = vld [vmem:[#allocation10 + $0x138] sm:$0xff]
    %v585 = vld [vmem:[#allocation10 + $0x140] sm:$0xff]
    %v586 = vld [vmem:[#allocation10 + $0x148] sm:$0xff]
    %v587 = vld [vmem:[#allocation10 + $0x150] sm:$0xff]
    %v588 = vld [vmem:[#allocation10 + $0x158] sm:$0xff]
    %v589 = vld [vmem:[#allocation10 + $0x160] sm:$0xff]
    %v590 = vld [vmem:[#allocation10 + $0x168] sm:$0xff]
    %v591 = vld [vmem:[#allocation10 + $0x170] sm:$0xff]
    %v592 = vld [vmem:[#allocation10 + $0x178] sm:$0xff]
    %v593 = vld [vmem:[#allocation10 + $0x180] sm:$0xff]
    %v594 = vld [vmem:[#allocation10 + $0x188] sm:$0xff]
    %v595 = vld [vmem:[#allocation10 + $0x190] sm:$0xff]
    %v596 = vld [vmem:[#allocation10 + $0x198] sm:$0xff]
    %v597 = vld [vmem:[#allocation10 + $0x1a0] sm:$0xff]
    %v598 = vld [vmem:[#allocation10 + $0x1a8] sm:$0xff]
    %v599 = vld [vmem:[#allocation10 + $0x1b0] sm:$0xff]
    %v600 = vld [vmem:[#allocation10 + $0x1b8] sm:$0xff]
    %v601 = vld [vmem:[#allocation10 + $0x1c0] sm:$0xff]
    %v602 = vld [vmem:[#allocation10 + $0x1c8] sm:$0xff]
    %v603 = vld [vmem:[#allocation10 + $0x1d0] sm:$0xff]
    %v604 = vld [vmem:[#allocation10 + $0x1d8] sm:$0xff]
    %v605 = vld [vmem:[#allocation10 + $0x1e0] sm:$0xff]
    %v606 = vld [vmem:[#allocation10 + $0x1e8] sm:$0xff]
    %v607 = vld [vmem:[#allocation10 + $0x1f0] sm:$0xff]
    %v608 = vld [vmem:[#allocation10 + $0x1f8] sm:$0xff]
    %v609 = vld [vmem:[#allocation11] sm:$0xf]
    %v611 = vperm.slane %v609, 0
    %v612 = vperm.slane %v609, 1
    %v613 = vperm.slane %v609, 2
    %v614 = vperm.slane %v609, 3
    %619 = vmatpush.msra.mxu0 %v605
    %620 = vmatpush.msra.mxu0 %v601
    %621 = vmatpush.msra.mxu0 %v597
    %622 = vmatpush.msra.mxu0 %v593
    %623 = vmatpush.msra.mxu0 %v589
    %624 = vmatpush.msra.mxu0 %v585
    %625 = vmatpush.msra.mxu0 %v581
    %626 = vmatpush.msra.mxu0 %v577
    %627 = vmatpush.msra.mxu0 %v573
    %628 = vmatpush.msra.mxu0 %v569
    %629 = vmatpush.msra.mxu0 %v565
    %630 = vmatpush.msra.mxu0 %v561
    %631 = vmatpush.msra.mxu0 %v557
    %632 = vmatpush.msra.mxu0 %v553
    %633 = vmatpush.msra.mxu0 %v549
    %634 = vmatpush.msra.mxu0 %v545
    %635 = vmatmul.f32.gmra.mxu0 %v161
    %v636 = vpop.f32.mrf.mxu0
    %v637 = vadd.f32 %v611, %v636
    %638 = vmatmul.f32.gmra.mxu0 %v162
    %v639 = vpop.f32.mrf.mxu0
    %v640 = vadd.f32 %v611, %v639
    %641 = vmatmul.f32.gmra.mxu0 %v163
    %v642 = vpop.f32.mrf.mxu0
    %v643 = vadd.f32 %v611, %v642
    %644 = vmatmul.f32.gmra.mxu0 %v164
    %v645 = vpop.f32.mrf.mxu0
    %v646 = vadd.f32 %v611, %v645
    %647 = vdwg.mxu0
    %648 = vmatpush.msra.mxu0 %v606
    %649 = vmatpush.msra.mxu0 %v602
    %650 = vmatpush.msra.mxu0 %v598
    %651 = vmatpush.msra.mxu0 %v594
    %652 = vmatpush.msra.mxu0 %v590
    %653 = vmatpush.msra.mxu0 %v586
    %654 = vmatpush.msra.mxu0 %v582
    %655 = vmatpush.msra.mxu0 %v578
    %656 = vmatpush.msra.mxu0 %v574
    %657 = vmatpush.msra.mxu0 %v570
    %658 = vmatpush.msra.mxu0 %v566
    %659 = vmatpush.msra.mxu0 %v562
    %660 = vmatpush.msra.mxu0 %v558
    %661 = vmatpush.msra.mxu0 %v554
    %662 = vmatpush.msra.mxu0 %v550
    %663 = vmatpush.msra.mxu0 %v546
    %664 = vmatmul.f32.gmra.mxu0 %v161
    %v665 = vpop.f32.mrf.mxu0
    %v666 = vadd.f32 %v612, %v665
    %667 = vmatmul.f32.gmra.mxu0 %v162
    %v668 = vpop.f32.mrf.mxu0
    %v669 = vadd.f32 %v612, %v668
    %670 = vmatmul.f32.gmra.mxu0 %v163
    %v671 = vpop.f32.mrf.mxu0
    %v672 = vadd.f32 %v612, %v671
    %673 = vmatmul.f32.gmra.mxu0 %v164
    %v674 = vpop.f32.mrf.mxu0
    %v675 = vadd.f32 %v612, %v674
    %676 = vdwg.mxu0
    %677 = vmatpush.msra.mxu0 %v607
    %678 = vmatpush.msra.mxu0 %v603
    %679 = vmatpush.msra.mxu0 %v599
    %680 = vmatpush.msra.mxu0 %v595
    %681 = vmatpush.msra.mxu0 %v591
    %682 = vmatpush.msra.mxu0 %v587
    %683 = vmatpush.msra.mxu0 %v583
    %684 = vmatpush.msra.mxu0 %v579
    %685 = vmatpush.msra.mxu0 %v575
    %686 = vmatpush.msra.mxu0 %v571
    %687 = vmatpush.msra.mxu0 %v567
    %688 = vmatpush.msra.mxu0 %v563
    %689 = vmatpush.msra.mxu0 %v559
    %690 = vmatpush.msra.mxu0 %v555
    %691 = vmatpush.msra.mxu0 %v551
    %692 = vmatpush.msra.mxu0 %v547
    %693 = vmatmul.f32.gmra.mxu0 %v161
    %v694 = vpop.f32.mrf.mxu0
    %v695 = vadd.f32 %v613, %v694
    %696 = vmatmul.f32.gmra.mxu0 %v162
    %v697 = vpop.f32.mrf.mxu0
    %v698 = vadd.f32 %v613, %v697
    %699 = vmatmul.f32.gmra.mxu0 %v163
    %v700 = vpop.f32.mrf.mxu0
    %v701 = vadd.f32 %v613, %v700
    %702 = vmatmul.f32.gmra.mxu0 %v164
    %v703 = vpop.f32.mrf.mxu0
    %v704 = vadd.f32 %v613, %v703
    %705 = vdwg.mxu0
    %706 = vmatpush.msra.mxu0 %v608
    %707 = vmatpush.msra.mxu0 %v604
    %708 = vmatpush.msra.mxu0 %v600
    %709 = vmatpush.msra.mxu0 %v596
    %710 = vmatpush.msra.mxu0 %v592
    %711 = vmatpush.msra.mxu0 %v588
    %712 = vmatpush.msra.mxu0 %v584
    %713 = vmatpush.msra.mxu0 %v580
    %714 = vmatpush.msra.mxu0 %v576
    %715 = vmatpush.msra.mxu0 %v572
    %716 = vmatpush.msra.mxu0 %v568
    %717 = vmatpush.msra.mxu0 %v564
    %718 = vmatpush.msra.mxu0 %v560
    %719 = vmatpush.msra.mxu0 %v556
    %720 = vmatpush.msra.mxu0 %v552
    %721 = vmatpush.msra.mxu0 %v548
    %722 = vmatmul.f32.gmra.mxu0 %v161
    %v723 = vpop.f32.mrf.mxu0
    %v724 = vadd.f32 %v614, %v723
    %725 = vmatmul.f32.gmra.mxu0 %v162
    %v726 = vpop.f32.mrf.mxu0
    %v727 = vadd.f32 %v614, %v726
    %728 = vmatmul.f32.gmra.mxu0 %v163
    %v729 = vpop.f32.mrf.mxu0
    %v730 = vadd.f32 %v614, %v729
    %731 = vmatmul.f32.gmra.mxu0 %v164
    %v732 = vpop.f32.mrf.mxu0
    %v733 = vadd.f32 %v614, %v732
    %734 = vdwg.mxu0
    %v735 = vmul.f32 %v257, %v447
    %v736 = vmul.f32 %v286, %v476
    %v737 = vmul.f32 %v315, %v505
    %v738 = vmul.f32 %v344, %v534
    %v739 = vmul.f32 %v260, %v450
    %v740 = vmul.f32 %v289, %v479
    %v741 = vmul.f32 %v318, %v508
    %v742 = vmul.f32 %v347, %v537
    %v743 = vmul.f32 %v263, %v453
    %v744 = vmul.f32 %v292, %v482
    %v745 = vmul.f32 %v321, %v511
    %v746 = vmul.f32 %v350, %v540
    %v747 = vmul.f32 %v266, %v456
    %v748 = vmul.f32 %v295, %v485
    %v749 = vmul.f32 %v324, %v514
    %v750 = vmul.f32 %v353, %v543
    %v751 = vld [vmem:[%s7] sm:$0xff]
    %v752 = vld [vmem:[%s7 + $0x8] sm:$0xff]
    %v753 = vld [vmem:[%s7 + $0x10] sm:$0xff]
    %v754 = vld [vmem:[%s7 + $0x18] sm:$0xff]
    %v755 = vld [vmem:[%s7 + $0x20] sm:$0xff]
    %v756 = vld [vmem:[%s7 + $0x28] sm:$0xff]
    %v757 = vld [vmem:[%s7 + $0x30] sm:$0xff]
    %v758 = vld [vmem:[%s7 + $0x38] sm:$0xff]
    %v759 = vld [vmem:[%s7 + $0x40] sm:$0xff]
    %v760 = vld [vmem:[%s7 + $0x48] sm:$0xff]
    %v761 = vld [vmem:[%s7 + $0x50] sm:$0xff]
    %v762 = vld [vmem:[%s7 + $0x58] sm:$0xff]
    %v763 = vld [vmem:[%s7 + $0x60] sm:$0xff]
    %v764 = vld [vmem:[%s7 + $0x68] sm:$0xff]
    %v765 = vld [vmem:[%s7 + $0x70] sm:$0xff]
    %v766 = vld [vmem:[%s7 + $0x78] sm:$0xff]
    %v767 = vld [vmem:[%s7 + $0x80] sm:$0xff]
    %v768 = vld [vmem:[%s7 + $0x88] sm:$0xff]
    %v769 = vld [vmem:[%s7 + $0x90] sm:$0xff]
    %v770 = vld [vmem:[%s7 + $0x98] sm:$0xff]
    %v771 = vld [vmem:[%s7 + $0xa0] sm:$0xff]
    %v772 = vld [vmem:[%s7 + $0xa8] sm:$0xff]
    %v773 = vld [vmem:[%s7 + $0xb0] sm:$0xff]
    %v774 = vld [vmem:[%s7 + $0xb8] sm:$0xff]
    %v775 = vld [vmem:[%s7 + $0xc0] sm:$0xff]
    %v776 = vld [vmem:[%s7 + $0xc8] sm:$0xff]
    %v777 = vld [vmem:[%s7 + $0xd0] sm:$0xff]
    %v778 = vld [vmem:[%s7 + $0xd8] sm:$0xff]
    %v779 = vld [vmem:[%s7 + $0xe0] sm:$0xff]
    %v780 = vld [vmem:[%s7 + $0xe8] sm:$0xff]
    %v781 = vld [vmem:[%s7 + $0xf0] sm:$0xff]
    %v782 = vld [vmem:[%s7 + $0xf8] sm:$0xff]
    %v783 = vld [vmem:[%s7 + $0x100] sm:$0xff]
    %v784 = vld [vmem:[%s7 + $0x108] sm:$0xff]
    %v785 = vld [vmem:[%s7 + $0x110] sm:$0xff]
    %v786 = vld [vmem:[%s7 + $0x118] sm:$0xff]
    %v787 = vld [vmem:[%s7 + $0x120] sm:$0xff]
    %v788 = vld [vmem:[%s7 + $0x128] sm:$0xff]
    %v789 = vld [vmem:[%s7 + $0x130] sm:$0xff]
    %v790 = vld [vmem:[%s7 + $0x138] sm:$0xff]
    %v791 = vld [vmem:[%s7 + $0x140] sm:$0xff]
    %v792 = vld [vmem:[%s7 + $0x148] sm:$0xff]
    %v793 = vld [vmem:[%s7 + $0x150] sm:$0xff]
    %v794 = vld [vmem:[%s7 + $0x158] sm:$0xff]
    %v795 = vld [vmem:[%s7 + $0x160] sm:$0xff]
    %v796 = vld [vmem:[%s7 + $0x168] sm:$0xff]
    %v797 = vld [vmem:[%s7 + $0x170] sm:$0xff]
    %v798 = vld [vmem:[%s7 + $0x178] sm:$0xff]
    %v799 = vld [vmem:[%s7 + $0x180] sm:$0xff]
    %v800 = vld [vmem:[%s7 + $0x188] sm:$0xff]
    %v801 = vld [vmem:[%s7 + $0x190] sm:$0xff]
    %v802 = vld [vmem:[%s7 + $0x198] sm:$0xff]
    %v803 = vld [vmem:[%s7 + $0x1a0] sm:$0xff]
    %v804 = vld [vmem:[%s7 + $0x1a8] sm:$0xff]
    %v805 = vld [vmem:[%s7 + $0x1b0] sm:$0xff]
    %v806 = vld [vmem:[%s7 + $0x1b8] sm:$0xff]
    %v807 = vld [vmem:[%s7 + $0x1c0] sm:$0xff]
    %v808 = vld [vmem:[%s7 + $0x1c8] sm:$0xff]
    %v809 = vld [vmem:[%s7 + $0x1d0] sm:$0xff]
    %v810 = vld [vmem:[%s7 + $0x1d8] sm:$0xff]
    %v811 = vld [vmem:[%s7 + $0x1e0] sm:$0xff]
    %v812 = vld [vmem:[%s7 + $0x1e8] sm:$0xff]
    %v813 = vld [vmem:[%s7 + $0x1f0] sm:$0xff]
    %v814 = vld [vmem:[%s7 + $0x1f8] sm:$0xff]
    %815 = vmatpush.msra.mxu0 %v766
    %816 = vmatpush.msra.mxu0 %v765
    %817 = vmatpush.msra.mxu0 %v764
    %818 = vmatpush.msra.mxu0 %v763
    %819 = vmatpush.msra.mxu0 %v762
    %820 = vmatpush.msra.mxu0 %v761
    %821 = vmatpush.msra.mxu0 %v760
    %822 = vmatpush.msra.mxu0 %v759
    %823 = vmatpush.msra.mxu0 %v758
    %824 = vmatpush.msra.mxu0 %v757
    %825 = vmatpush.msra.mxu0 %v756
    %826 = vmatpush.msra.mxu0 %v755
    %827 = vmatpush.msra.mxu0 %v754
    %828 = vmatpush.msra.mxu0 %v753
    %829 = vmatpush.msra.mxu0 %v752
    %830 = vmatpush.msra.mxu0 %v751
    %831 = vmatmul.f32.gmra.mxu0 %v735
    %v832 = vpop.f32.mrf.mxu0
    %v833 = vadd.f32 0.0, %v832
    %834 = vmatmul.f32.gmra.mxu0 %v739
    %v835 = vpop.f32.mrf.mxu0
    %v836 = vadd.f32 0.0, %v835
    %837 = vmatmul.f32.gmra.mxu0 %v743
    %v838 = vpop.f32.mrf.mxu0
    %v839 = vadd.f32 0.0, %v838
    %840 = vmatmul.f32.gmra.mxu0 %v747
    %v841 = vpop.f32.mrf.mxu0
    %v842 = vadd.f32 0.0, %v841
    %843 = vdwg.mxu0
    %844 = vmatpush.msra.mxu0 %v782
    %845 = vmatpush.msra.mxu0 %v781
    %846 = vmatpush.msra.mxu0 %v780
    %847 = vmatpush.msra.mxu0 %v779
    %848 = vmatpush.msra.mxu0 %v778
    %849 = vmatpush.msra.mxu0 %v777
    %850 = vmatpush.msra.mxu0 %v776
    %851 = vmatpush.msra.mxu0 %v775
    %852 = vmatpush.msra.mxu0 %v774
    %853 = vmatpush.msra.mxu0 %v773
    %854 = vmatpush.msra.mxu0 %v772
    %855 = vmatpush.msra.mxu0 %v771
    %856 = vmatpush.msra.mxu0 %v770
    %857 = vmatpush.msra.mxu0 %v769
    %858 = vmatpush.msra.mxu0 %v768
    %859 = vmatpush.msra.mxu0 %v767
    %860 = vmatmul.f32.gmra.mxu0 %v736
    %v861 = vpop.f32.mrf.mxu0
    %v862 = vadd.f32 %v833, %v861
    %863 = vmatmul.f32.gmra.mxu0 %v740
    %v864 = vpop.f32.mrf.mxu0
    %v865 = vadd.f32 %v836, %v864
    %866 = vmatmul.f32.gmra.mxu0 %v744
    %v867 = vpop.f32.mrf.mxu0
    %v868 = vadd.f32 %v839, %v867
    %869 = vmatmul.f32.gmra.mxu0 %v748
    %v870 = vpop.f32.mrf.mxu0
    %v871 = vadd.f32 %v842, %v870
    %872 = vdwg.mxu0
    %873 = vmatpush.msra.mxu0 %v798
    %874 = vmatpush.msra.mxu0 %v797
    %875 = vmatpush.msra.mxu0 %v796
    %876 = vmatpush.msra.mxu0 %v795
    %877 = vmatpush.msra.mxu0 %v794
    %878 = vmatpush.msra.mxu0 %v793
    %879 = vmatpush.msra.mxu0 %v792
    %880 = vmatpush.msra.mxu0 %v791
    %881 = vmatpush.msra.mxu0 %v790
    %882 = vmatpush.msra.mxu0 %v789
    %883 = vmatpush.msra.mxu0 %v788
    %884 = vmatpush.msra.mxu0 %v787
    %885 = vmatpush.msra.mxu0 %v786
    %886 = vmatpush.msra.mxu0 %v785
    %887 = vmatpush.msra.mxu0 %v784
    %888 = vmatpush.msra.mxu0 %v783
    %889 = vmatmul.f32.gmra.mxu0 %v737
    %v890 = vpop.f32.mrf.mxu0
    %v891 = vadd.f32 %v862, %v890
    %892 = vmatmul.f32.gmra.mxu0 %v741
    %v893 = vpop.f32.mrf.mxu0
    %v894 = vadd.f32 %v865, %v893
    %895 = vmatmul.f32.gmra.mxu0 %v745
    %v896 = vpop.f32.mrf.mxu0
    %v897 = vadd.f32 %v868, %v896
    %898 = vmatmul.f32.gmra.mxu0 %v749
    %v899 = vpop.f32.mrf.mxu0
    %v900 = vadd.f32 %v871, %v899
    %901 = vdwg.mxu0
    %902 = vmatpush.msra.mxu0 %v814
    %903 = vmatpush.msra.mxu0 %v813
    %904 = vmatpush.msra.mxu0 %v812
    %905 = vmatpush.msra.mxu0 %v811
    %906 = vmatpush.msra.mxu0 %v810
    %907 = vmatpush.msra.mxu0 %v809
    %908 = vmatpush.msra.mxu0 %v808
    %909 = vmatpush.msra.mxu0 %v807
    %910 = vmatpush.msra.mxu0 %v806
    %911 = vmatpush.msra.mxu0 %v805
    %912 = vmatpush.msra.mxu0 %v804
    %913 = vmatpush.msra.mxu0 %v803
    %914 = vmatpush.msra.mxu0 %v802
    %915 = vmatpush.msra.mxu0 %v801
    %916 = vmatpush.msra.mxu0 %v800
    %917 = vmatpush.msra.mxu0 %v799
    %918 = vmatmul.f32.gmra.mxu0 %v738
    %v919 = vpop.f32.mrf.mxu0
    %v920 = vadd.f32 %v891, %v919
    %921 = vmatmul.f32.gmra.mxu0 %v742
    %v922 = vpop.f32.mrf.mxu0
    %v923 = vadd.f32 %v894, %v922
    %924 = vmatmul.f32.gmra.mxu0 %v746
    %v925 = vpop.f32.mrf.mxu0
    %v926 = vadd.f32 %v897, %v925
    %927 = vmatmul.f32.gmra.mxu0 %v750
    %v928 = vpop.f32.mrf.mxu0
    %v929 = vadd.f32 %v900, %v928
    %930 = vdwg.mxu0
    %vm931 = vcmask 523264
    %v932 = vsel %vm931, %v920, -inf
    %933 = vmax.xlane.f32.xlu0 %v932
    %v934 = vpop.xlane.xlu0 %933
    %v935 = vsel %vm931, %v923, -inf
    %936 = vmax.xlane.f32.xlu0 %v935
    %v937 = vpop.xlane.xlu0 %936
    %v938 = vsel %vm931, %v926, -inf
    %939 = vmax.xlane.f32.xlu0 %v938
    %v940 = vpop.xlane.xlu0 %939
    %v941 = vsel %vm931, %v929, -inf
    %942 = vmax.xlane.f32.xlu0 %v941
    %v943 = vpop.xlane.xlu0 %942
    %v944 = vsub.f32 %v920, %v934
    %v945 = vsub.f32 %v923, %v937
    %v946 = vsub.f32 %v926, %v940
    %v947 = vsub.f32 %v929, %v943
    %v948 = vmul.f32 %v944, 1.442695
    %v949 = vpow.pop %v948
    %v950 = vmul.f32 %v945, 1.442695
    %v951 = vpow.pop %v950
    %v952 = vmul.f32 %v946, 1.442695
    %v953 = vpow.pop %v952
    %v954 = vmul.f32 %v947, 1.442695
    %v955 = vpow.pop %v954
    %v956 = vld [vmem:[#allocation13] sm:$0xff]
    %v957 = vld [vmem:[#allocation13 + $0x8] sm:$0xff]
    %v958 = vld [vmem:[#allocation13 + $0x10] sm:$0xff]
    %v959 = vld [vmem:[#allocation13 + $0x18] sm:$0xff]
    %v960 = vld [vmem:[#allocation13 + $0x20] sm:$0xff]
    %v961 = vld [vmem:[#allocation13 + $0x28] sm:$0xff]
    %v962 = vld [vmem:[#allocation13 + $0x30] sm:$0xff]
    %v963 = vld [vmem:[#allocation13 + $0x38] sm:$0xff]
    %v965 = vsel %vm931, %v949, 0
    %v968 = vsel %vm931, %v951, 0
    %v971 = vsel %vm931, %v953, 0
    %v974 = vsel %vm931, %v955, 0
    %976 = vmatpush.msra.mxu0 0.0
    %977 = vmatpush.msra.mxu0 0.0
    %978 = vmatpush.msra.mxu0 0.0
    %979 = vmatpush.msra.mxu0 0.0
    %980 = vmatpush.msra.mxu0 0.0
    %981 = vmatpush.msra.mxu0 0.0
    %982 = vmatpush.msra.mxu0 0.0
    %983 = vmatpush.msra.mxu0 0.0
    %984 = vmatpush.msra.mxu0 %v963
    %985 = vmatpush.msra.mxu0 %v962
    %986 = vmatpush.msra.mxu0 %v961
    %987 = vmatpush.msra.mxu0 %v960
    %988 = vmatpush.msra.mxu0 %v959
    %989 = vmatpush.msra.mxu0 %v958
    %990 = vmatpush.msra.mxu0 %v957
    %991 = vmatpush.msra.mxu0 %v956
    %992 = vmatmul.f32.gmra.mxu0 %v965
    %v993 = vpop.f32.mrf.mxu0
    %v994 = vadd.f32 0.0, %v993
    %995 = vmatmul.f32.gmra.mxu0 %v968
    %v996 = vpop.f32.mrf.mxu0
    %v997 = vadd.f32 0.0, %v996
    %998 = vmatmul.f32.gmra.mxu0 %v971
    %v999 = vpop.f32.mrf.mxu0
    %v1000 = vadd.f32 0.0, %v999
    %1001 = vmatmul.f32.gmra.mxu0 %v974
    %v1002 = vpop.f32.mrf.mxu0
    %v1003 = vadd.f32 0.0, %v1002
    %1004 = vdwg.mxu0
    %v1005 = vrcp.pop %v994
    %v1006 = vmul.f32 %v994, %v1005
    %v1007 = vsub.f32 1.0, %v1006
    %v1008 = vmul.f32 %v1005, %v1007
    %v1009 = vadd.f32 %v1005, %v1008
    %vm1010 = vweird.f32 %v994
    %vm1011 = vweird.f32 %v1005
    %vm1012 = vmor %vm1010, %vm1011
    %v1013 = vsel %vm1012, %v1005, %v1009
    %v1014 = vand.u32 2147483647, %v994
    %vm1015 = vcmp.eq.f32.partialorder %v1014, 8.507059e+37
    %v1016 = vand.u32 %v994, 2147483648
    %v1017 = vor.u32 1.1754944e-38, %v1016
    %v1018 = vsel %vm1015, %v1017, %v1013
    %v1019 = vmul.f32 %v949, %v1018
    %v1020 = vrcp.pop %v997
    %v1021 = vmul.f32 %v997, %v1020
    %v1022 = vsub.f32 1.0, %v1021
    %v1023 = vmul.f32 %v1020, %v1022
    %v1024 = vadd.f32 %v1020, %v1023
    %vm1025 = vweird.f32 %v997
    %vm1026 = vweird.f32 %v1020
    %vm1027 = vmor %vm1025, %vm1026
    %v1028 = vsel %vm1027, %v1020, %v1024
    %v1029 = vand.u32 2147483647, %v997
    %vm1030 = vcmp.eq.f32.partialorder %v1029, 8.507059e+37
    %v1031 = vand.u32 %v997, 2147483648
    %v1032 = vor.u32 1.1754944e-38, %v1031
    %v1033 = vsel %vm1030, %v1032, %v1028
    %v1034 = vmul.f32 %v951, %v1033
    %v1035 = vrcp.pop %v1000
    %v1036 = vmul.f32 %v1000, %v1035
    %v1037 = vsub.f32 1.0, %v1036
    %v1038 = vmul.f32 %v1035, %v1037
    %v1039 = vadd.f32 %v1035, %v1038
    %vm1040 = vweird.f32 %v1000
    %vm1041 = vweird.f32 %v1035
    %vm1042 = vmor %vm1040, %vm1041
    %v1043 = vsel %vm1042, %v1035, %v1039
    %v1044 = vand.u32 2147483647, %v1000
    %vm1045 = vcmp.eq.f32.partialorder %v1044, 8.507059e+37
    %v1046 = vand.u32 %v1000, 2147483648
    %v1047 = vor.u32 1.1754944e-38, %v1046
    %v1048 = vsel %vm1045, %v1047, %v1043
    %v1049 = vmul.f32 %v953, %v1048
    %v1050 = vrcp.pop %v1003
    %v1051 = vmul.f32 %v1003, %v1050
    %v1052 = vsub.f32 1.0, %v1051
    %v1053 = vmul.f32 %v1050, %v1052
    %v1054 = vadd.f32 %v1050, %v1053
    %vm1055 = vweird.f32 %v1003
    %vm1056 = vweird.f32 %v1050
    %vm1057 = vmor %vm1055, %vm1056
    %v1058 = vsel %vm1057, %v1050, %v1054
    %v1059 = vand.u32 2147483647, %v1003
    %vm1060 = vcmp.eq.f32.partialorder %v1059, 8.507059e+37
    %v1061 = vand.u32 %v1003, 2147483648
    %v1062 = vor.u32 1.1754944e-38, %v1061
    %v1063 = vsel %vm1060, %v1062, %v1058
    %v1064 = vmul.f32 %v955, %v1063
    %v1065 = vld [vmem:[%s9] sm:$0xff]
    %v1066 = vld [vmem:[%s9 + $0x8] sm:$0xff]
    %v1067 = vld [vmem:[%s9 + $0x10] sm:$0xff]
    %v1068 = vld [vmem:[%s9 + $0x18] sm:$0xff]
    %v1069 = vld [vmem:[%s9 + $0x20] sm:$0xff]
    %v1070 = vld [vmem:[%s9 + $0x28] sm:$0xff]
    %v1071 = vld [vmem:[%s9 + $0x30] sm:$0xff]
    %v1072 = vld [vmem:[%s9 + $0x38] sm:$0xff]
    %v1073 = vld [vmem:[%s9 + $0x40] sm:$0xff]
    %v1074 = vld [vmem:[%s9 + $0x48] sm:$0xff]
    %v1075 = vld [vmem:[%s9 + $0x50] sm:$0xff]
    %v1076 = vld [vmem:[%s9 + $0x58] sm:$0xff]
    %v1077 = vld [vmem:[%s9 + $0x60] sm:$0xff]
    %v1078 = vld [vmem:[%s9 + $0x68] sm:$0xff]
    %v1079 = vld [vmem:[%s9 + $0x70] sm:$0xff]
    %v1080 = vld [vmem:[%s9 + $0x78] sm:$0xff]
    %v1081 = vld [vmem:[%s9 + $0x80] sm:$0xff]
    %v1082 = vld [vmem:[%s9 + $0x88] sm:$0xff]
    %v1083 = vld [vmem:[%s9 + $0x90] sm:$0xff]
    %v1084 = vld [vmem:[%s9 + $0x98] sm:$0xff]
    %v1085 = vld [vmem:[%s9 + $0xa0] sm:$0xff]
    %v1086 = vld [vmem:[%s9 + $0xa8] sm:$0xff]
    %v1087 = vld [vmem:[%s9 + $0xb0] sm:$0xff]
    %v1088 = vld [vmem:[%s9 + $0xb8] sm:$0xff]
    %v1089 = vld [vmem:[%s9 + $0xc0] sm:$0xff]
    %v1090 = vld [vmem:[%s9 + $0xc8] sm:$0xff]
    %v1091 = vld [vmem:[%s9 + $0xd0] sm:$0xff]
    %v1092 = vld [vmem:[%s9 + $0xd8] sm:$0xff]
    %v1093 = vld [vmem:[%s9 + $0xe0] sm:$0xff]
    %v1094 = vld [vmem:[%s9 + $0xe8] sm:$0xff]
    %v1095 = vld [vmem:[%s9 + $0xf0] sm:$0xff]
    %v1096 = vld [vmem:[%s9 + $0xf8] sm:$0xff]
    %v1098 = vsel %vm931, %v1019, 0
    %v1101 = vsel %vm931, %v1034, 0
    %v1104 = vsel %vm931, %v1049, 0
    %v1107 = vsel %vm931, %v1064, 0
    %1109 = vmatpush.msra.mxu0 0.0
    %1110 = vmatpush.msra.mxu0 0.0
    %1111 = vmatpush.msra.mxu0 0.0
    %1112 = vmatpush.msra.mxu0 0.0
    %1113 = vmatpush.msra.mxu0 0.0
    %1114 = vmatpush.msra.mxu0 0.0
    %1115 = vmatpush.msra.mxu0 0.0
    %1116 = vmatpush.msra.mxu0 0.0
    %1117 = vmatpush.msra.mxu0 %v1093
    %1118 = vmatpush.msra.mxu0 %v1089
    %1119 = vmatpush.msra.mxu0 %v1085
    %1120 = vmatpush.msra.mxu0 %v1081
    %1121 = vmatpush.msra.mxu0 %v1077
    %1122 = vmatpush.msra.mxu0 %v1073
    %1123 = vmatpush.msra.mxu0 %v1069
    %1124 = vmatpush.msra.mxu0 %v1065
    %1125 = vmatmul.f32.gmra.mxu0 %v1098
    %v1126 = vpop.f32.mrf.mxu0
    %v1127 = vadd.f32 0.0, %v1126
    %1128 = vmatmul.f32.gmra.mxu0 %v1101
    %v1129 = vpop.f32.mrf.mxu0
    %v1130 = vadd.f32 0.0, %v1129
    %1131 = vmatmul.f32.gmra.mxu0 %v1104
    %v1132 = vpop.f32.mrf.mxu0
    %v1133 = vadd.f32 0.0, %v1132
    %1134 = vmatmul.f32.gmra.mxu0 %v1107
    %v1135 = vpop.f32.mrf.mxu0
    %v1136 = vadd.f32 0.0, %v1135
    %1137 = vdwg.mxu0
    %1138 = vmatpush.msra.mxu0 0.0
    %1139 = vmatpush.msra.mxu0 0.0
    %1140 = vmatpush.msra.mxu0 0.0
    %1141 = vmatpush.msra.mxu0 0.0
    %1142 = vmatpush.msra.mxu0 0.0
    %1143 = vmatpush.msra.mxu0 0.0
    %1144 = vmatpush.msra.mxu0 0.0
    %1145 = vmatpush.msra.mxu0 0.0
    %1146 = vmatpush.msra.mxu0 %v1094
    %1147 = vmatpush.msra.mxu0 %v1090
    %1148 = vmatpush.msra.mxu0 %v1086
    %1149 = vmatpush.msra.mxu0 %v1082
    %1150 = vmatpush.msra.mxu0 %v1078
    %1151 = vmatpush.msra.mxu0 %v1074
    %1152 = vmatpush.msra.mxu0 %v1070
    %1153 = vmatpush.msra.mxu0 %v1066
    %1154 = vmatmul.f32.gmra.mxu0 %v1098
    %v1155 = vpop.f32.mrf.mxu0
    %v1156 = vadd.f32 0.0, %v1155
    %1157 = vmatmul.f32.gmra.mxu0 %v1101
    %v1158 = vpop.f32.mrf.mxu0
    %v1159 = vadd.f32 0.0, %v1158
    %1160 = vmatmul.f32.gmra.mxu0 %v1104
    %v1161 = vpop.f32.mrf.mxu0
    %v1162 = vadd.f32 0.0, %v1161
    %1163 = vmatmul.f32.gmra.mxu0 %v1107
    %v1164 = vpop.f32.mrf.mxu0
    %v1165 = vadd.f32 0.0, %v1164
    %1166 = vdwg.mxu0
    %1167 = vmatpush.msra.mxu0 0.0
    %1168 = vmatpush.msra.mxu0 0.0
    %1169 = vmatpush.msra.mxu0 0.0
    %1170 = vmatpush.msra.mxu0 0.0
    %1171 = vmatpush.msra.mxu0 0.0
    %1172 = vmatpush.msra.mxu0 0.0
    %1173 = vmatpush.msra.mxu0 0.0
    %1174 = vmatpush.msra.mxu0 0.0
    %1175 = vmatpush.msra.mxu0 %v1095
    %1176 = vmatpush.msra.mxu0 %v1091
    %1177 = vmatpush.msra.mxu0 %v1087
    %1178 = vmatpush.msra.mxu0 %v1083
    %1179 = vmatpush.msra.mxu0 %v1079
    %1180 = vmatpush.msra.mxu0 %v1075
    %1181 = vmatpush.msra.mxu0 %v1071
    %1182 = vmatpush.msra.mxu0 %v1067
    %1183 = vmatmul.f32.gmra.mxu0 %v1098
    %v1184 = vpop.f32.mrf.mxu0
    %v1185 = vadd.f32 0.0, %v1184
    %1186 = vmatmul.f32.gmra.mxu0 %v1101
    %v1187 = vpop.f32.mrf.mxu0
    %v1188 = vadd.f32 0.0, %v1187
    %1189 = vmatmul.f32.gmra.mxu0 %v1104
    %v1190 = vpop.f32.mrf.mxu0
    %v1191 = vadd.f32 0.0, %v1190
    %1192 = vmatmul.f32.gmra.mxu0 %v1107
    %v1193 = vpop.f32.mrf.mxu0
    %v1194 = vadd.f32 0.0, %v1193
    %1195 = vdwg.mxu0
    %1196 = vmatpush.msra.mxu0 0.0
    %1197 = vmatpush.msra.mxu0 0.0
    %1198 = vmatpush.msra.mxu0 0.0
    %1199 = vmatpush.msra.mxu0 0.0
    %1200 = vmatpush.msra.mxu0 0.0
    %1201 = vmatpush.msra.mxu0 0.0
    %1202 = vmatpush.msra.mxu0 0.0
    %1203 = vmatpush.msra.mxu0 0.0
    %1204 = vmatpush.msra.mxu0 %v1096
    %1205 = vmatpush.msra.mxu0 %v1092
    %1206 = vmatpush.msra.mxu0 %v1088
    %1207 = vmatpush.msra.mxu0 %v1084
    %1208 = vmatpush.msra.mxu0 %v1080
    %1209 = vmatpush.msra.mxu0 %v1076
    %1210 = vmatpush.msra.mxu0 %v1072
    %1211 = vmatpush.msra.mxu0 %v1068
    %1212 = vmatmul.f32.gmra.mxu0 %v1098
    %v1213 = vpop.f32.mrf.mxu0
    %v1214 = vadd.f32 0.0, %v1213
    %1215 = vmatmul.f32.gmra.mxu0 %v1101
    %v1216 = vpop.f32.mrf.mxu0
    %v1217 = vadd.f32 0.0, %v1216
    %1218 = vmatmul.f32.gmra.mxu0 %v1104
    %v1219 = vpop.f32.mrf.mxu0
    %v1220 = vadd.f32 0.0, %v1219
    %1221 = vmatmul.f32.gmra.mxu0 %v1107
    %v1222 = vpop.f32.mrf.mxu0
    %v1223 = vadd.f32 0.0, %v1222
    %1224 = vdwg.mxu0
    %v1225 = vmul.f32 %v1127, %v637
    %v1226 = vmul.f32 %v1156, %v666
    %v1227 = vmul.f32 %v1185, %v695
    %v1228 = vmul.f32 %v1214, %v724
    %v1229 = vmul.f32 %v1130, %v640
    %v1230 = vmul.f32 %v1159, %v669
    %v1231 = vmul.f32 %v1188, %v698
    %v1232 = vmul.f32 %v1217, %v727
    %v1233 = vmul.f32 %v1133, %v643
    %v1234 = vmul.f32 %v1162, %v672
    %v1235 = vmul.f32 %v1191, %v701
    %v1236 = vmul.f32 %v1220, %v730
    %v1237 = vmul.f32 %v1136, %v646
    %v1238 = vmul.f32 %v1165, %v675
    %v1239 = vmul.f32 %v1194, %v704
    %v1240 = vmul.f32 %v1223, %v733
    %v1241 = vld [vmem:[#allocation14] sm:$0xff]
    %v1242 = vld [vmem:[#allocation14 + $0x8] sm:$0xff]
    %v1243 = vld [vmem:[#allocation14 + $0x10] sm:$0xff]
    %v1244 = vld [vmem:[#allocation14 + $0x18] sm:$0xff]
    %v1245 = vld [vmem:[#allocation14 + $0x20] sm:$0xff]
    %v1246 = vld [vmem:[#allocation14 + $0x28] sm:$0xff]
    %v1247 = vld [vmem:[#allocation14 + $0x30] sm:$0xff]
    %v1248 = vld [vmem:[#allocation14 + $0x38] sm:$0xff]
    %v1249 = vld [vmem:[#allocation14 + $0x40] sm:$0xff]
    %v1250 = vld [vmem:[#allocation14 + $0x48] sm:$0xff]
    %v1251 = vld [vmem:[#allocation14 + $0x50] sm:$0xff]
    %v1252 = vld [vmem:[#allocation14 + $0x58] sm:$0xff]
    %v1253 = vld [vmem:[#allocation14 + $0x60] sm:$0xff]
    %v1254 = vld [vmem:[#allocation14 + $0x68] sm:$0xff]
    %v1255 = vld [vmem:[#allocation14 + $0x70] sm:$0xff]
    %v1256 = vld [vmem:[#allocation14 + $0x78] sm:$0xff]
    %v1257 = vld [vmem:[#allocation14 + $0x80] sm:$0xff]
    %v1258 = vld [vmem:[#allocation14 + $0x88] sm:$0xff]
    %v1259 = vld [vmem:[#allocation14 + $0x90] sm:$0xff]
    %v1260 = vld [vmem:[#allocation14 + $0x98] sm:$0xff]
    %v1261 = vld [vmem:[#allocation14 + $0xa0] sm:$0xff]
    %v1262 = vld [vmem:[#allocation14 + $0xa8] sm:$0xff]
    %v1263 = vld [vmem:[#allocation14 + $0xb0] sm:$0xff]
    %v1264 = vld [vmem:[#allocation14 + $0xb8] sm:$0xff]
    %v1265 = vld [vmem:[#allocation14 + $0xc0] sm:$0xff]
    %v1266 = vld [vmem:[#allocation14 + $0xc8] sm:$0xff]
    %v1267 = vld [vmem:[#allocation14 + $0xd0] sm:$0xff]
    %v1268 = vld [vmem:[#allocation14 + $0xd8] sm:$0xff]
    %v1269 = vld [vmem:[#allocation14 + $0xe0] sm:$0xff]
    %v1270 = vld [vmem:[#allocation14 + $0xe8] sm:$0xff]
    %v1271 = vld [vmem:[#allocation14 + $0xf0] sm:$0xff]
    %v1272 = vld [vmem:[#allocation14 + $0xf8] sm:$0xff]
    %v1273 = vld [vmem:[#allocation14 + $0x100] sm:$0xff]
    %v1274 = vld [vmem:[#allocation14 + $0x108] sm:$0xff]
    %v1275 = vld [vmem:[#allocation14 + $0x110] sm:$0xff]
    %v1276 = vld [vmem:[#allocation14 + $0x118] sm:$0xff]
    %v1277 = vld [vmem:[#allocation14 + $0x120] sm:$0xff]
    %v1278 = vld [vmem:[#allocation14 + $0x128] sm:$0xff]
    %v1279 = vld [vmem:[#allocation14 + $0x130] sm:$0xff]
    %v1280 = vld [vmem:[#allocation14 + $0x138] sm:$0xff]
    %v1281 = vld [vmem:[#allocation14 + $0x140] sm:$0xff]
    %v1282 = vld [vmem:[#allocation14 + $0x148] sm:$0xff]
    %v1283 = vld [vmem:[#allocation14 + $0x150] sm:$0xff]
    %v1284 = vld [vmem:[#allocation14 + $0x158] sm:$0xff]
    %v1285 = vld [vmem:[#allocation14 + $0x160] sm:$0xff]
    %v1286 = vld [vmem:[#allocation14 + $0x168] sm:$0xff]
    %v1287 = vld [vmem:[#allocation14 + $0x170] sm:$0xff]
    %v1288 = vld [vmem:[#allocation14 + $0x178] sm:$0xff]
    %v1289 = vld [vmem:[#allocation14 + $0x180] sm:$0xff]
    %v1290 = vld [vmem:[#allocation14 + $0x188] sm:$0xff]
    %v1291 = vld [vmem:[#allocation14 + $0x190] sm:$0xff]
    %v1292 = vld [vmem:[#allocation14 + $0x198] sm:$0xff]
    %v1293 = vld [vmem:[#allocation14 + $0x1a0] sm:$0xff]
    %v1294 = vld [vmem:[#allocation14 + $0x1a8] sm:$0xff]
    %v1295 = vld [vmem:[#allocation14 + $0x1b0] sm:$0xff]
    %v1296 = vld [vmem:[#allocation14 + $0x1b8] sm:$0xff]
    %v1297 = vld [vmem:[#allocation14 + $0x1c0] sm:$0xff]
    %v1298 = vld [vmem:[#allocation14 + $0x1c8] sm:$0xff]
    %v1299 = vld [vmem:[#allocation14 + $0x1d0] sm:$0xff]
    %v1300 = vld [vmem:[#allocation14 + $0x1d8] sm:$0xff]
    %v1301 = vld [vmem:[#allocation14 + $0x1e0] sm:$0xff]
    %v1302 = vld [vmem:[#allocation14 + $0x1e8] sm:$0xff]
    %v1303 = vld [vmem:[#allocation14 + $0x1f0] sm:$0xff]
    %v1304 = vld [vmem:[#allocation14 + $0x1f8] sm:$0xff]
    %v1305 = vld [vmem:[%s11] sm:$0x1]
    %v1307 = vperm.slane %v1305, 0
    %1309 = vmatpush.msra.mxu0 %v1256
    %1310 = vmatpush.msra.mxu0 %v1255
    %1311 = vmatpush.msra.mxu0 %v1254
    %1312 = vmatpush.msra.mxu0 %v1253
    %1313 = vmatpush.msra.mxu0 %v1252
    %1314 = vmatpush.msra.mxu0 %v1251
    %1315 = vmatpush.msra.mxu0 %v1250
    %1316 = vmatpush.msra.mxu0 %v1249
    %1317 = vmatpush.msra.mxu0 %v1248
    %1318 = vmatpush.msra.mxu0 %v1247
    %1319 = vmatpush.msra.mxu0 %v1246
    %1320 = vmatpush.msra.mxu0 %v1245
    %1321 = vmatpush.msra.mxu0 %v1244
    %1322 = vmatpush.msra.mxu0 %v1243
    %1323 = vmatpush.msra.mxu0 %v1242
    %1324 = vmatpush.msra.mxu0 %v1241
    %1325 = vmatmul.f32.gmra.mxu0 %v1225
    %v1326 = vpop.f32.mrf.mxu0
    %v1327 = vadd.f32 %v1307, %v1326
    %1328 = vmatmul.f32.gmra.mxu0 %v1229
    %v1329 = vpop.f32.mrf.mxu0
    %v1330 = vadd.f32 %v1307, %v1329
    %1331 = vmatmul.f32.gmra.mxu0 %v1233
    %v1332 = vpop.f32.mrf.mxu0
    %v1333 = vadd.f32 %v1307, %v1332
    %1334 = vmatmul.f32.gmra.mxu0 %v1237
    %v1335 = vpop.f32.mrf.mxu0
    %v1336 = vadd.f32 %v1307, %v1335
    %1337 = vdwg.mxu0
    %1338 = vmatpush.msra.mxu0 %v1272
    %1339 = vmatpush.msra.mxu0 %v1271
    %1340 = vmatpush.msra.mxu0 %v1270
    %1341 = vmatpush.msra.mxu0 %v1269
    %1342 = vmatpush.msra.mxu0 %v1268
    %1343 = vmatpush.msra.mxu0 %v1267
    %1344 = vmatpush.msra.mxu0 %v1266
    %1345 = vmatpush.msra.mxu0 %v1265
    %1346 = vmatpush.msra.mxu0 %v1264
    %1347 = vmatpush.msra.mxu0 %v1263
    %1348 = vmatpush.msra.mxu0 %v1262
    %1349 = vmatpush.msra.mxu0 %v1261
    %1350 = vmatpush.msra.mxu0 %v1260
    %1351 = vmatpush.msra.mxu0 %v1259
    %1352 = vmatpush.msra.mxu0 %v1258
    %1353 = vmatpush.msra.mxu0 %v1257
    %1354 = vmatmul.f32.gmra.mxu0 %v1226
    %v1355 = vpop.f32.mrf.mxu0
    %v1356 = vadd.f32 %v1327, %v1355
    %1357 = vmatmul.f32.gmra.mxu0 %v1230
    %v1358 = vpop.f32.mrf.mxu0
    %v1359 = vadd.f32 %v1330, %v1358
    %1360 = vmatmul.f32.gmra.mxu0 %v1234
    %v1361 = vpop.f32.mrf.mxu0
    %v1362 = vadd.f32 %v1333, %v1361
    %1363 = vmatmul.f32.gmra.mxu0 %v1238
    %v1364 = vpop.f32.mrf.mxu0
    %v1365 = vadd.f32 %v1336, %v1364
    %1366 = vdwg.mxu0
    %1367 = vmatpush.msra.mxu0 %v1288
    %1368 = vmatpush.msra.mxu0 %v1287
    %1369 = vmatpush.msra.mxu0 %v1286
    %1370 = vmatpush.msra.mxu0 %v1285
    %1371 = vmatpush.msra.mxu0 %v1284
    %1372 = vmatpush.msra.mxu0 %v1283
    %1373 = vmatpush.msra.mxu0 %v1282
    %1374 = vmatpush.msra.mxu0 %v1281
    %1375 = vmatpush.msra.mxu0 %v1280
    %1376 = vmatpush.msra.mxu0 %v1279
    %1377 = vmatpush.msra.mxu0 %v1278
    %1378 = vmatpush.msra.mxu0 %v1277
    %1379 = vmatpush.msra.mxu0 %v1276
    %1380 = vmatpush.msra.mxu0 %v1275
    %1381 = vmatpush.msra.mxu0 %v1274
    %1382 = vmatpush.msra.mxu0 %v1273
    %1383 = vmatmul.f32.gmra.mxu0 %v1227
    %v1384 = vpop.f32.mrf.mxu0
    %v1385 = vadd.f32 %v1356, %v1384
    %1386 = vmatmul.f32.gmra.mxu0 %v1231
    %v1387 = vpop.f32.mrf.mxu0
    %v1388 = vadd.f32 %v1359, %v1387
    %1389 = vmatmul.f32.gmra.mxu0 %v1235
    %v1390 = vpop.f32.mrf.mxu0
    %v1391 = vadd.f32 %v1362, %v1390
    %1392 = vmatmul.f32.gmra.mxu0 %v1239
    %v1393 = vpop.f32.mrf.mxu0
    %v1394 = vadd.f32 %v1365, %v1393
    %1395 = vdwg.mxu0
    %1396 = vmatpush.msra.mxu0 %v1304
    %1397 = vmatpush.msra.mxu0 %v1303
    %1398 = vmatpush.msra.mxu0 %v1302
    %1399 = vmatpush.msra.mxu0 %v1301
    %1400 = vmatpush.msra.mxu0 %v1300
    %1401 = vmatpush.msra.mxu0 %v1299
    %1402 = vmatpush.msra.mxu0 %v1298
    %1403 = vmatpush.msra.mxu0 %v1297
    %1404 = vmatpush.msra.mxu0 %v1296
    %1405 = vmatpush.msra.mxu0 %v1295
    %1406 = vmatpush.msra.mxu0 %v1294
    %1407 = vmatpush.msra.mxu0 %v1293
    %1408 = vmatpush.msra.mxu0 %v1292
    %1409 = vmatpush.msra.mxu0 %v1291
    %1410 = vmatpush.msra.mxu0 %v1290
    %1411 = vmatpush.msra.mxu0 %v1289
    %1412 = vmatmul.f32.gmra.mxu0 %v1228
    %v1413 = vpop.f32.mrf.mxu0
    %v1414 = vadd.f32 %v1385, %v1413
    %1415 = vmatmul.f32.gmra.mxu0 %v1232
    %v1416 = vpop.f32.mrf.mxu0
    %v1417 = vadd.f32 %v1388, %v1416
    %1418 = vmatmul.f32.gmra.mxu0 %v1236
    %v1419 = vpop.f32.mrf.mxu0
    %v1420 = vadd.f32 %v1391, %v1419
    %1421 = vmatmul.f32.gmra.mxu0 %v1240
    %v1422 = vpop.f32.mrf.mxu0
    %v1423 = vadd.f32 %v1394, %v1422
    %1424 = vdwg.mxu0
    %1425 = vst [vmem:[#allocation16] sm:$0xff] %v1414
    %1426 = vst [vmem:[#allocation16 + $0x8] sm:$0xff] %v1417
    %1427 = vst [vmem:[#allocation16 + $0x10] sm:$0xff] %v1420
    %1428 = vst [vmem:[#allocation16 + $0x18] sm:$0xff] %v1423
    // Predicated region
    $region82: #{tpu_custom_call.1} parent=1 // pred_check
      _
    $region83: #{tpu_custom_call.1} parent=1 // pred_check_branch
      %1430 = sbr.rel (0) target = $region85
    $region84: #{tpu_custom_call.1} parent=1 // pred_region
      %1432 = vsyncadd [#allocation4], 0
      %s1433 = sshll.u32 [#allocation16], 4
      %s1434 = int_to_ptr.vmem [resolvable:$true] %s1433
      %s1435 = sshll.u32 %s12, 4
      %s1436 = int_to_ptr.hbm [resolvable:$true] %s1435
      %1441 = dma.vmem_to_hbm [thread:$0]  %s1434, 512, %s1436, [#allocation4], 128, 128, 8
    $region85: #{tpu_custom_call.1} parent=1 // pred_fallthru
      _
    // Predicated region
    $region86: #{tpu_custom_call.1} parent=1 // pred_check
      _
    $region87: #{tpu_custom_call.1} parent=1 // pred_check_branch
      %1443 = sbr.rel (0) target = $region89
    $region88: #{tpu_custom_call.1} parent=1 // pred_region
      %1445 = dma.done [#allocation4], 512
    $region89: #{tpu_custom_call.1} parent=1 // pred_fallthru
      _
    %1446 = vsyncpa [#allocation3], 1
    %1447 = vsyncpa [#allocation6], 1
    %1448 = vsyncpa [#allocation9], 1
    %1449 = vsyncpa [#allocation12], 1
    %1450 = vsyncpa [#allocation15], 1
    %1451 = vsyncpa [#allocation4], 1

</llo_original>
